<compile_context>
chip_gen: v7x
topology: tpu7x:2x2x1
jax: 0.10.0
libtpu: 0.0.40
codegen_flags: <defaults>
</compile_context>

<pallas_src>
import functools

import jax
import jax.numpy as jnp
from jax.experimental import pallas as pl
from jax.experimental.pallas import tpu as pltpu

# ----- synthetic "opts" (small, deterministic) ------------------------------
BATCH_SIZE = 2          # opts.batch_size
EMB_DIM = 128           # opts.emb_dim
NUM_OF_INGR = 32        # opts.numofingr
FEAT_C = 2048           # ResNet50 feature channels
FEAT_H = 4              # spatial size of the backbone feature map
FEAT_W = 4


# ----- Pallas kernel ---------------------------------------------------------
def im_embed_kernel(x_ref, w_ref, b_ref, out_ref):
    """x_ref:  (B, HW, C) bf16  backbone feature map, NHWC-flattened (C lane-dense)
       w_ref:  (C, N)     bf16  fused [W_emb^T | W_len^T] weight, 1/HW pre-folded
       b_ref:  (1, N)     f32   fused [b_emb   | b_len  ] bias
       out_ref:(B, N)     f32   fused head output (sliced into heads by wrapper)."""
    # AdaptiveAvgPool2d((1,1)) + .view(B, 2048): spatial SUM in f32 accumulation
    # (the 1/HW scale lives in the bf16 weight — exact, since HW is a power of 2).
    pooled = jnp.sum(x_ref[...].astype(jnp.float32), axis=1)       # (B, C) f32

    # Both Linear heads in one MXU matmul (bf16 in, f32 accumulate).
    acc = jnp.dot(pooled.astype(jnp.bfloat16), w_ref[...],
                  preferred_element_type=jnp.float32)               # (B, N) f32

    out_ref[...] = acc + b_ref[...]


# ----- one-time parameter preparation (NOT per-forward) ----------------------
def prepare_head_params(w_emb, b_emb, w_len, b_len, hw):
    """Transpose the PyTorch (out,in) Linear weights to (in,out), fuse the two
    heads along the output axis (no zero padding), fold the 1/HW average-pool
    scale into the weight, and cast to bf16. Done once at param-load time."""
    w_cat = jnp.concatenate([w_emb.T, w_len.T], axis=1)             # (C, E+L) f32
    w_fused = (w_cat * (1.0 / hw)).astype(jnp.bfloat16)             # (C, E+L) bf16
    b_fused = jnp.concatenate([b_emb, b_len], axis=0)[None, :]      # (1, E+L) f32
    return w_fused, b_fused.astype(jnp.float32)


# ----- forward ---------------------------------------------------------------
@functools.partial(jax.jit, static_argnames=("emb_dim", "numofingr"))
def im_embed_forward(feat_nchw, w_fused, b_fused, *, emb_dim, numofingr):
    """feat_nchw: (B, 2048, H, W) backbone feature map (PyTorch NCHW).
    Returns [emb (B, emb_dim), ingr_length (B, numofingr)]."""
    B, C, H, W = feat_nchw.shape
    n = w_fused.shape[1]

    # NCHW -> (B, HW, C): channels on the lane axis (contiguous DMA, no in-kernel
    # relayout), cast to bf16 (the MXU consumes bf16 anyway -> half the DMA bytes).
    # If the backbone is JAX-native, emit NHWC/bf16 directly and skip this.
    x = jnp.transpose(feat_nchw, (0, 2, 3, 1)).reshape(B, H * W, C)
    x = x.astype(jnp.bfloat16)

    vmem = pl.BlockSpec(memory_space=pltpu.MemorySpace.VMEM)
    cost = pl.CostEstimate(
        flops=2 * B * C * n + B * C * H * W,
        transcendentals=0,
        bytes_accessed=(x.size * 2            # feature map (bf16)
                        + w_fused.size * 2    # fused weight (bf16)
                        + b_fused.size * 4    # fused bias (f32)
                        + B * n * 4),         # fused output (f32)
    )

    # Gridless: whole problem (~0.9 MiB) fits easily in VMEM on v5e/v6e/v7x and
    # there is nothing to pipeline; a grid would only add per-step overhead.
    fused_out = pl.pallas_call(
        im_embed_kernel,
        out_shape=jax.ShapeDtypeStruct((B, n), jnp.float32),
        in_specs=[vmem, vmem, vmem],
        out_specs=vmem,
        cost_estimate=cost,
    )(x, w_fused, b_fused)

    # Slice the fused output back into the two heads.
    emb = fused_out[:, :emb_dim]
    ingr_length = fused_out[:, emb_dim:emb_dim + numofingr]
    return [emb, ingr_length]


# ----- deterministic parameter init (PyTorch nn.Linear default: U(-k, k)) ----
def init_linear(key, out_features, in_features):
    k = 1.0 / jnp.sqrt(jnp.float32(in_features))
    kw, kb = jax.random.split(key)
    w = jax.random.uniform(kw, (out_features, in_features), jnp.float32, -k, k)
    b = jax.random.uniform(kb, (out_features,), jnp.float32, -k, k)
    return w, b


if __name__ == "__main__":
    key = jax.random.PRNGKey(0)
    k_x, k_emb, k_len = jax.random.split(key, 3)

    # Synthetic backbone feature map (output of the ResNet50 conv tower), NCHW.
    feat = jax.random.normal(k_x, (BATCH_SIZE, FEAT_C, FEAT_H, FEAT_W),
                             dtype=jnp.float32)

    w_emb, b_emb = init_linear(k_emb, EMB_DIM, FEAT_C)
    w_len, b_len = init_linear(k_len, NUM_OF_INGR, FEAT_C)

    # One-time fusion/transpose/scale-fold/bf16 cast of the two Linear heads.
    w_fused, b_fused = prepare_head_params(w_emb, b_emb, w_len, b_len,
                                           hw=FEAT_H * FEAT_W)

    emb, ingr_length = im_embed_forward(feat, w_fused, b_fused,
                                        emb_dim=EMB_DIM, numofingr=NUM_OF_INGR)
    jax.block_until_ready(emb)
    jax.block_until_ready(ingr_length)

    # Pure-JAX f32 reference of the post-backbone forward math.
    pooled_ref = jnp.mean(feat, axis=(2, 3))                        # (B, 2048)
    emb_ref = pooled_ref @ w_emb.T + b_emb
    len_ref = pooled_ref @ w_len.T + b_len

    assert emb.shape == (BATCH_SIZE, EMB_DIM)
    assert ingr_length.shape == (BATCH_SIZE, NUM_OF_INGR)
    # bf16 weights/activations for the dot -> loosened tolerance vs f32 ref.
    assert jnp.allclose(emb, emb_ref, atol=2e-2, rtol=2e-2), \
        float(jnp.max(jnp.abs(emb - emb_ref)))
    assert jnp.allclose(ingr_length, len_ref, atol=2e-2, rtol=2e-2), \
        float(jnp.max(jnp.abs(ingr_length - len_ref)))

    print("KERNEL_OK")
</pallas_src>

<mosaic_0001>
module attributes {stable_mosaic.version = 11 : i64} {
  func.func @im_embed_kernel(%arg0: memref<2x16x2048xbf16, #tpu.memory_space<vmem>>, %arg1: memref<2048x160xbf16, #tpu.memory_space<vmem>>, %arg2: memref<1x160xf32, #tpu.memory_space<vmem>>, %arg3: memref<2x160xf32, #tpu.memory_space<vmem>>) attributes {dimension_semantics = [], scalar_prefetch = 0 : i64, scratch_operands = 0 : i64, tpu.core_type = #tpu.core_type<tc>} {
    %c0 = arith.constant 0 : index
    %c0_0 = arith.constant 0 : index
    %c0_1 = arith.constant 0 : index
    %0 = vector.load %arg0[%c0, %c0_0, %c0_1] : memref<2x16x2048xbf16, #tpu.memory_space<vmem>>, vector<2x16x2048xbf16>
    %1 = arith.extf %0 : vector<2x16x2048xbf16> to vector<2x16x2048xf32>
    %cst = arith.constant dense<0.000000e+00> : vector<2x2048xf32>
    %2 = vector.multi_reduction <add>, %1, %cst [1] : vector<2x16x2048xf32> to vector<2x2048xf32>
    %3 = arith.truncf %2 : vector<2x2048xf32> to vector<2x2048xbf16>
    %c0_2 = arith.constant 0 : index
    %c0_3 = arith.constant 0 : index
    %4 = vector.load %arg1[%c0_2, %c0_3] : memref<2048x160xbf16, #tpu.memory_space<vmem>>, vector<2048x160xbf16>
    %cst_4 = arith.constant dense<0.000000e+00> : vector<2x160xf32>
    %5 = tpu.matmul %3, %4, %cst_4 {dimension_numbers = #tpu.dot_dimension_numbers<[1], [0], [0], [1], [0, 0, 1, 1], [], []>} : vector<2x2048xbf16>, vector<2048x160xbf16>, vector<2x160xf32> -> vector<2x160xf32>
    %c0_5 = arith.constant 0 : index
    %c0_6 = arith.constant 0 : index
    %6 = vector.load %arg2[%c0_5, %c0_6] : memref<1x160xf32, #tpu.memory_space<vmem>>, vector<1x160xf32>
    %7 = vector.broadcast %6 : vector<1x160xf32> to vector<2x160xf32>
    %8 = arith.addf %5, %7 : vector<2x160xf32>
    %c0_7 = arith.constant 0 : index
    %c0_8 = arith.constant 0 : index
    %9 = vector.load %arg3[%c0_7, %c0_8] : memref<2x160xf32, #tpu.memory_space<vmem>>, vector<2x160xf32>
    tpu.vector_store %arg3[%c0_7, %c0_8], %8 {strides = array<i32>} : memref<2x160xf32, #tpu.memory_space<vmem>>, vector<2x160xf32>,
    return
  }
}

</mosaic_0001>

<llo_original>
// kernel: im_embed_forward.1
$region0: #{im_embed_forward.1}
  #allocation0 [shape = 'u32[]', space=smem, size = 0x4, offset = 0x4, fixed_abs, tag = 'smem constant byte address 0x4 - core index']
  #allocation1 [shape = 'u32[144,128]{1,0:T(1,128)}', space=vmem, size = 0x12000, scoped, tag = 'internal scratch']
  %s0 = inlined_call_operand.vmem [shape: bf16[2,16,2048], index: 0, kind: input, shape index: {}]
  %s1 = inlined_call_operand.vmem [shape: bf16[2048,160], index: 1, kind: input, shape index: {}]
  %s2 = inlined_call_operand.vmem [shape: f32[1,160], index: 2, kind: input, shape index: {}]
  %s3 = inlined_call_operand.vmem [shape: f32[2,160], index: 3, kind: output, shape index: {}]
  %s4 = sld [smem:[#allocation0]]
  $region22: #{im_embed_forward.1} parent=0
    _
  %s6 = ssub.s32 1, %s4
  %s7 = scalar_select 0, %s6, %s4
  // Predicated region
  $region2: #{im_embed_forward.1} parent=0 // pred_check
    _
  $region3: #{im_embed_forward.1} parent=0 // pred_check_branch
    %9 = sbr.rel (0) target = $region5
  $region4: #{im_embed_forward.1} parent=0 // pred_region
    _
  $region5: #{im_embed_forward.1} parent=0 // pred_fallthru
    _
  // Predicated region
  $region6: #{im_embed_forward.1} parent=0 // pred_check
    _
  $region7: #{im_embed_forward.1} parent=0 // pred_check_branch
    %11 = sbr.rel (0) target = $region9
  $region8: #{im_embed_forward.1} parent=0 // pred_region
    _
  $region9: #{im_embed_forward.1} parent=0 // pred_fallthru
    _
  // Predicated region
  $region10: #{im_embed_forward.1} parent=0 // pred_check
    _
  $region11: #{im_embed_forward.1} parent=0 // pred_check_branch
    %13 = sbr.rel (0) target = $region13
  $region12: #{im_embed_forward.1} parent=0 // pred_region
    _
  $region13: #{im_embed_forward.1} parent=0 // pred_fallthru
    _
  %v14 = vld [vmem:[%s0] sm:$0xff]
  %v15 = vld [vmem:[%s0 + $0x8] sm:$0xff]
  %v16 = vld [vmem:[%s0 + $0x10] sm:$0xff]
  %v17 = vld [vmem:[%s0 + $0x18] sm:$0xff]
  %v18 = vld [vmem:[%s0 + $0x20] sm:$0xff]
  %v19 = vld [vmem:[%s0 + $0x28] sm:$0xff]
  %v20 = vld [vmem:[%s0 + $0x30] sm:$0xff]
  %v21 = vld [vmem:[%s0 + $0x38] sm:$0xff]
  %v22 = vld [vmem:[%s0 + $0x40] sm:$0xff]
  %v23 = vld [vmem:[%s0 + $0x48] sm:$0xff]
  %v24 = vld [vmem:[%s0 + $0x50] sm:$0xff]
  %v25 = vld [vmem:[%s0 + $0x58] sm:$0xff]
  %v26 = vld [vmem:[%s0 + $0x60] sm:$0xff]
  %v27 = vld [vmem:[%s0 + $0x68] sm:$0xff]
  %v28 = vld [vmem:[%s0 + $0x70] sm:$0xff]
  %v29 = vld [vmem:[%s0 + $0x78] sm:$0xff]
  %v30 = vld [vmem:[%s0 + $0x80] sm:$0xff]
  %v31 = vld [vmem:[%s0 + $0x88] sm:$0xff]
  %v32 = vld [vmem:[%s0 + $0x90] sm:$0xff]
  %v33 = vld [vmem:[%s0 + $0x98] sm:$0xff]
  %v34 = vld [vmem:[%s0 + $0xa0] sm:$0xff]
  %v35 = vld [vmem:[%s0 + $0xa8] sm:$0xff]
  %v36 = vld [vmem:[%s0 + $0xb0] sm:$0xff]
  %v37 = vld [vmem:[%s0 + $0xb8] sm:$0xff]
  %v38 = vld [vmem:[%s0 + $0xc0] sm:$0xff]
  %v39 = vld [vmem:[%s0 + $0xc8] sm:$0xff]
  %v40 = vld [vmem:[%s0 + $0xd0] sm:$0xff]
  %v41 = vld [vmem:[%s0 + $0xd8] sm:$0xff]
  %v42 = vld [vmem:[%s0 + $0xe0] sm:$0xff]
  %v43 = vld [vmem:[%s0 + $0xe8] sm:$0xff]
  %v44 = vld [vmem:[%s0 + $0xf0] sm:$0xff]
  %v45 = vld [vmem:[%s0 + $0xf8] sm:$0xff]
  %v46 = vunpack.c.l.bf16 %v14
  %v47 = vunpack.c.h.bf16 %v14
  %v48 = vunpack.c.l.bf16 %v15
  %v49 = vunpack.c.h.bf16 %v15
  %v50 = vunpack.c.l.bf16 %v16
  %v51 = vunpack.c.h.bf16 %v16
  %v52 = vunpack.c.l.bf16 %v17
  %v53 = vunpack.c.h.bf16 %v17
  %v54 = vunpack.c.l.bf16 %v18
  %v55 = vunpack.c.h.bf16 %v18
  %v56 = vunpack.c.l.bf16 %v19
  %v57 = vunpack.c.h.bf16 %v19
  %v58 = vunpack.c.l.bf16 %v20
  %v59 = vunpack.c.h.bf16 %v20
  %v60 = vunpack.c.l.bf16 %v21
  %v61 = vunpack.c.h.bf16 %v21
  %v62 = vunpack.c.l.bf16 %v22
  %v63 = vunpack.c.h.bf16 %v22
  %v64 = vunpack.c.l.bf16 %v23
  %v65 = vunpack.c.h.bf16 %v23
  %v66 = vunpack.c.l.bf16 %v24
  %v67 = vunpack.c.h.bf16 %v24
  %v68 = vunpack.c.l.bf16 %v25
  %v69 = vunpack.c.h.bf16 %v25
  %v70 = vunpack.c.l.bf16 %v26
  %v71 = vunpack.c.h.bf16 %v26
  %v72 = vunpack.c.l.bf16 %v27
  %v73 = vunpack.c.h.bf16 %v27
  %v74 = vunpack.c.l.bf16 %v28
  %v75 = vunpack.c.h.bf16 %v28
  %v76 = vunpack.c.l.bf16 %v29
  %v77 = vunpack.c.h.bf16 %v29
  %v78 = vunpack.c.l.bf16 %v30
  %v79 = vunpack.c.h.bf16 %v30
  %v80 = vunpack.c.l.bf16 %v31
  %v81 = vunpack.c.h.bf16 %v31
  %v82 = vunpack.c.l.bf16 %v32
  %v83 = vunpack.c.h.bf16 %v32
  %v84 = vunpack.c.l.bf16 %v33
  %v85 = vunpack.c.h.bf16 %v33
  %v86 = vunpack.c.l.bf16 %v34
  %v87 = vunpack.c.h.bf16 %v34
  %v88 = vunpack.c.l.bf16 %v35
  %v89 = vunpack.c.h.bf16 %v35
  %v90 = vunpack.c.l.bf16 %v36
  %v91 = vunpack.c.h.bf16 %v36
  %v92 = vunpack.c.l.bf16 %v37
  %v93 = vunpack.c.h.bf16 %v37
  %v94 = vunpack.c.l.bf16 %v38
  %v95 = vunpack.c.h.bf16 %v38
  %v96 = vunpack.c.l.bf16 %v39
  %v97 = vunpack.c.h.bf16 %v39
  %v98 = vunpack.c.l.bf16 %v40
  %v99 = vunpack.c.h.bf16 %v40
  %v100 = vunpack.c.l.bf16 %v41
  %v101 = vunpack.c.h.bf16 %v41
  %v102 = vunpack.c.l.bf16 %v42
  %v103 = vunpack.c.h.bf16 %v42
  %v104 = vunpack.c.l.bf16 %v43
  %v105 = vunpack.c.h.bf16 %v43
  %v106 = vunpack.c.l.bf16 %v44
  %v107 = vunpack.c.h.bf16 %v44
  %v108 = vunpack.c.l.bf16 %v45
  %v109 = vunpack.c.h.bf16 %v45
  %v110 = vadd.f32 %v46, %v62
  %v111 = vrot.slane %v110, 4
  %v112 = vadd.f32 %v110, %v111
  %v113 = vrot.slane %v112, 2
  %v114 = vadd.f32 %v112, %v113
  %v115 = vrot.slane %v114, 1
  %v116 = vadd.f32 %v114, %v115
  %v117 = vadd.f32 %v47, %v63
  %v118 = vrot.slane %v117, 4
  %v119 = vadd.f32 %v117, %v118
  %v120 = vrot.slane %v119, 2
  %v121 = vadd.f32 %v119, %v120
  %v122 = vrot.slane %v121, 1
  %v123 = vadd.f32 %v121, %v122
  %v124 = vadd.f32 %v48, %v64
  %v125 = vrot.slane %v124, 4
  %v126 = vadd.f32 %v124, %v125
  %v127 = vrot.slane %v126, 2
  %v128 = vadd.f32 %v126, %v127
  %v129 = vrot.slane %v128, 1
  %v130 = vadd.f32 %v128, %v129
  %v131 = vadd.f32 %v49, %v65
  %v132 = vrot.slane %v131, 4
  %v133 = vadd.f32 %v131, %v132
  %v134 = vrot.slane %v133, 2
  %v135 = vadd.f32 %v133, %v134
  %v136 = vrot.slane %v135, 1
  %v137 = vadd.f32 %v135, %v136
  %v138 = vadd.f32 %v50, %v66
  %v139 = vrot.slane %v138, 4
  %v140 = vadd.f32 %v138, %v139
  %v141 = vrot.slane %v140, 2
  %v142 = vadd.f32 %v140, %v141
  %v143 = vrot.slane %v142, 1
  %v144 = vadd.f32 %v142, %v143
  %v145 = vadd.f32 %v51, %v67
  %v146 = vrot.slane %v145, 4
  %v147 = vadd.f32 %v145, %v146
  %v148 = vrot.slane %v147, 2
  %v149 = vadd.f32 %v147, %v148
  %v150 = vrot.slane %v149, 1
  %v151 = vadd.f32 %v149, %v150
  %v152 = vadd.f32 %v52, %v68
  %v153 = vrot.slane %v152, 4
  %v154 = vadd.f32 %v152, %v153
  %v155 = vrot.slane %v154, 2
  %v156 = vadd.f32 %v154, %v155
  %v157 = vrot.slane %v156, 1
  %v158 = vadd.f32 %v156, %v157
  %v159 = vadd.f32 %v53, %v69
  %v160 = vrot.slane %v159, 4
  %v161 = vadd.f32 %v159, %v160
  %v162 = vrot.slane %v161, 2
  %v163 = vadd.f32 %v161, %v162
  %v164 = vrot.slane %v163, 1
  %v165 = vadd.f32 %v163, %v164
  %v166 = vadd.f32 %v54, %v70
  %v167 = vrot.slane %v166, 4
  %v168 = vadd.f32 %v166, %v167
  %v169 = vrot.slane %v168, 2
  %v170 = vadd.f32 %v168, %v169
  %v171 = vrot.slane %v170, 1
  %v172 = vadd.f32 %v170, %v171
  %v173 = vadd.f32 %v55, %v71
  %v174 = vrot.slane %v173, 4
  %v175 = vadd.f32 %v173, %v174
  %v176 = vrot.slane %v175, 2
  %v177 = vadd.f32 %v175, %v176
  %v178 = vrot.slane %v177, 1
  %v179 = vadd.f32 %v177, %v178
  %v180 = vadd.f32 %v56, %v72
  %v181 = vrot.slane %v180, 4
  %v182 = vadd.f32 %v180, %v181
  %v183 = vrot.slane %v182, 2
  %v184 = vadd.f32 %v182, %v183
  %v185 = vrot.slane %v184, 1
  %v186 = vadd.f32 %v184, %v185
  %v187 = vadd.f32 %v57, %v73
  %v188 = vrot.slane %v187, 4
  %v189 = vadd.f32 %v187, %v188
  %v190 = vrot.slane %v189, 2
  %v191 = vadd.f32 %v189, %v190
  %v192 = vrot.slane %v191, 1
  %v193 = vadd.f32 %v191, %v192
  %v194 = vadd.f32 %v58, %v74
  %v195 = vrot.slane %v194, 4
  %v196 = vadd.f32 %v194, %v195
  %v197 = vrot.slane %v196, 2
  %v198 = vadd.f32 %v196, %v197
  %v199 = vrot.slane %v198, 1
  %v200 = vadd.f32 %v198, %v199
  %v201 = vadd.f32 %v59, %v75
  %v202 = vrot.slane %v201, 4
  %v203 = vadd.f32 %v201, %v202
  %v204 = vrot.slane %v203, 2
  %v205 = vadd.f32 %v203, %v204
  %v206 = vrot.slane %v205, 1
  %v207 = vadd.f32 %v205, %v206
  %v208 = vadd.f32 %v60, %v76
  %v209 = vrot.slane %v208, 4
  %v210 = vadd.f32 %v208, %v209
  %v211 = vrot.slane %v210, 2
  %v212 = vadd.f32 %v210, %v211
  %v213 = vrot.slane %v212, 1
  %v214 = vadd.f32 %v212, %v213
  %v215 = vadd.f32 %v61, %v77
  %v216 = vrot.slane %v215, 4
  %v217 = vadd.f32 %v215, %v216
  %v218 = vrot.slane %v217, 2
  %v219 = vadd.f32 %v217, %v218
  %v220 = vrot.slane %v219, 1
  %v221 = vadd.f32 %v219, %v220
  %v222 = vadd.f32 %v78, %v94
  %v223 = vrot.slane %v222, 4
  %v224 = vadd.f32 %v222, %v223
  %v225 = vrot.slane %v224, 2
  %v226 = vadd.f32 %v224, %v225
  %v227 = vrot.slane %v226, 1
  %v228 = vadd.f32 %v226, %v227
  %v229 = vadd.f32 %v79, %v95
  %v230 = vrot.slane %v229, 4
  %v231 = vadd.f32 %v229, %v230
  %v232 = vrot.slane %v231, 2
  %v233 = vadd.f32 %v231, %v232
  %v234 = vrot.slane %v233, 1
  %v235 = vadd.f32 %v233, %v234
  %v236 = vadd.f32 %v80, %v96
  %v237 = vrot.slane %v236, 4
  %v238 = vadd.f32 %v236, %v237
  %v239 = vrot.slane %v238, 2
  %v240 = vadd.f32 %v238, %v239
  %v241 = vrot.slane %v240, 1
  %v242 = vadd.f32 %v240, %v241
  %v243 = vadd.f32 %v81, %v97
  %v244 = vrot.slane %v243, 4
  %v245 = vadd.f32 %v243, %v244
  %v246 = vrot.slane %v245, 2
  %v247 = vadd.f32 %v245, %v246
  %v248 = vrot.slane %v247, 1
  %v249 = vadd.f32 %v247, %v248
  %v250 = vadd.f32 %v82, %v98
  %v251 = vrot.slane %v250, 4
  %v252 = vadd.f32 %v250, %v251
  %v253 = vrot.slane %v252, 2
  %v254 = vadd.f32 %v252, %v253
  %v255 = vrot.slane %v254, 1
  %v256 = vadd.f32 %v254, %v255
  %v257 = vadd.f32 %v83, %v99
  %v258 = vrot.slane %v257, 4
  %v259 = vadd.f32 %v257, %v258
  %v260 = vrot.slane %v259, 2
  %v261 = vadd.f32 %v259, %v260
  %v262 = vrot.slane %v261, 1
  %v263 = vadd.f32 %v261, %v262
  %v264 = vadd.f32 %v84, %v100
  %v265 = vrot.slane %v264, 4
  %v266 = vadd.f32 %v264, %v265
  %v267 = vrot.slane %v266, 2
  %v268 = vadd.f32 %v266, %v267
  %v269 = vrot.slane %v268, 1
  %v270 = vadd.f32 %v268, %v269
  %v271 = vadd.f32 %v85, %v101
  %v272 = vrot.slane %v271, 4
  %v273 = vadd.f32 %v271, %v272
  %v274 = vrot.slane %v273, 2
  %v275 = vadd.f32 %v273, %v274
  %v276 = vrot.slane %v275, 1
  %v277 = vadd.f32 %v275, %v276
  %v278 = vadd.f32 %v86, %v102
  %v279 = vrot.slane %v278, 4
  %v280 = vadd.f32 %v278, %v279
  %v281 = vrot.slane %v280, 2
  %v282 = vadd.f32 %v280, %v281
  %v283 = vrot.slane %v282, 1
  %v284 = vadd.f32 %v282, %v283
  %v285 = vadd.f32 %v87, %v103
  %v286 = vrot.slane %v285, 4
  %v287 = vadd.f32 %v285, %v286
  %v288 = vrot.slane %v287, 2
  %v289 = vadd.f32 %v287, %v288
  %v290 = vrot.slane %v289, 1
  %v291 = vadd.f32 %v289, %v290
  %v292 = vadd.f32 %v88, %v104
  %v293 = vrot.slane %v292, 4
  %v294 = vadd.f32 %v292, %v293
  %v295 = vrot.slane %v294, 2
  %v296 = vadd.f32 %v294, %v295
  %v297 = vrot.slane %v296, 1
  %v298 = vadd.f32 %v296, %v297
  %v299 = vadd.f32 %v89, %v105
  %v300 = vrot.slane %v299, 4
  %v301 = vadd.f32 %v299, %v300
  %v302 = vrot.slane %v301, 2
  %v303 = vadd.f32 %v301, %v302
  %v304 = vrot.slane %v303, 1
  %v305 = vadd.f32 %v303, %v304
  %v306 = vadd.f32 %v90, %v106
  %v307 = vrot.slane %v306, 4
  %v308 = vadd.f32 %v306, %v307
  %v309 = vrot.slane %v308, 2
  %v310 = vadd.f32 %v308, %v309
  %v311 = vrot.slane %v310, 1
  %v312 = vadd.f32 %v310, %v311
  %v313 = vadd.f32 %v91, %v107
  %v314 = vrot.slane %v313, 4
  %v315 = vadd.f32 %v313, %v314
  %v316 = vrot.slane %v315, 2
  %v317 = vadd.f32 %v315, %v316
  %v318 = vrot.slane %v317, 1
  %v319 = vadd.f32 %v317, %v318
  %v320 = vadd.f32 %v92, %v108
  %v321 = vrot.slane %v320, 4
  %v322 = vadd.f32 %v320, %v321
  %v323 = vrot.slane %v322, 2
  %v324 = vadd.f32 %v322, %v323
  %v325 = vrot.slane %v324, 1
  %v326 = vadd.f32 %v324, %v325
  %v327 = vadd.f32 %v93, %v109
  %v328 = vrot.slane %v327, 4
  %v329 = vadd.f32 %v327, %v328
  %v330 = vrot.slane %v329, 2
  %v331 = vadd.f32 %v329, %v330
  %v332 = vrot.slane %v331, 1
  %v333 = vadd.f32 %v331, %v332
  %v334 = vpack.c.bf16 %v116, %v116
  %v335 = vpack.c.bf16 %v123, %v123
  %v336 = vpack.c.bf16 %v130, %v130
  %v337 = vpack.c.bf16 %v137, %v137
  %v338 = vpack.c.bf16 %v144, %v144
  %v339 = vpack.c.bf16 %v151, %v151
  %v340 = vpack.c.bf16 %v158, %v158
  %v341 = vpack.c.bf16 %v165, %v165
  %v342 = vpack.c.bf16 %v172, %v172
  %v343 = vpack.c.bf16 %v179, %v179
  %v344 = vpack.c.bf16 %v186, %v186
  %v345 = vpack.c.bf16 %v193, %v193
  %v346 = vpack.c.bf16 %v200, %v200
  %v347 = vpack.c.bf16 %v207, %v207
  %v348 = vpack.c.bf16 %v214, %v214
  %v349 = vpack.c.bf16 %v221, %v221
  %v350 = vpack.c.bf16 %v228, %v228
  %v351 = vpack.c.bf16 %v235, %v235
  %v352 = vpack.c.bf16 %v242, %v242
  %v353 = vpack.c.bf16 %v249, %v249
  %v354 = vpack.c.bf16 %v256, %v256
  %v355 = vpack.c.bf16 %v263, %v263
  %v356 = vpack.c.bf16 %v270, %v270
  %v357 = vpack.c.bf16 %v277, %v277
  %v358 = vpack.c.bf16 %v284, %v284
  %v359 = vpack.c.bf16 %v291, %v291
  %v360 = vpack.c.bf16 %v298, %v298
  %v361 = vpack.c.bf16 %v305, %v305
  %v362 = vpack.c.bf16 %v312, %v312
  %v363 = vpack.c.bf16 %v319, %v319
  %v364 = vpack.c.bf16 %v326, %v326
  %v365 = vpack.c.bf16 %v333, %v333
  %v366 = vld [vmem:[%s1] sm:$0xff]
  %v367 = vld [vmem:[%s1 + $0x8] sm:$0xff]
  %v368 = vld [vmem:[%s1 + $0x10] sm:$0xff]
  %v369 = vld [vmem:[%s1 + $0x18] sm:$0xff]
  %v370 = vld [vmem:[%s1 + $0x20] sm:$0xff]
  %v371 = vld [vmem:[%s1 + $0x28] sm:$0xff]
  %v372 = vld [vmem:[%s1 + $0x30] sm:$0xff]
  %v373 = vld [vmem:[%s1 + $0x38] sm:$0xff]
  %v374 = vld [vmem:[%s1 + $0x40] sm:$0xff]
  %v375 = vld [vmem:[%s1 + $0x48] sm:$0xff]
  %v376 = vld [vmem:[%s1 + $0x50] sm:$0xff]
  %v377 = vld [vmem:[%s1 + $0x58] sm:$0xff]
  %v378 = vld [vmem:[%s1 + $0x60] sm:$0xff]
  %v379 = vld [vmem:[%s1 + $0x68] sm:$0xff]
  %v380 = vld [vmem:[%s1 + $0x70] sm:$0xff]
  %v381 = vld [vmem:[%s1 + $0x78] sm:$0xff]
  %v382 = vld [vmem:[%s1 + $0x80] sm:$0xff]
  %v383 = vld [vmem:[%s1 + $0x88] sm:$0xff]
  %v384 = vld [vmem:[%s1 + $0x90] sm:$0xff]
  %v385 = vld [vmem:[%s1 + $0x98] sm:$0xff]
  %v386 = vld [vmem:[%s1 + $0xa0] sm:$0xff]
  %v387 = vld [vmem:[%s1 + $0xa8] sm:$0xff]
  %v388 = vld [vmem:[%s1 + $0xb0] sm:$0xff]
  %v389 = vld [vmem:[%s1 + $0xb8] sm:$0xff]
  %v390 = vld [vmem:[%s1 + $0xc0] sm:$0xff]
  %v391 = vld [vmem:[%s1 + $0xc8] sm:$0xff]
  %v392 = vld [vmem:[%s1 + $0xd0] sm:$0xff]
  %v393 = vld [vmem:[%s1 + $0xd8] sm:$0xff]
  %v394 = vld [vmem:[%s1 + $0xe0] sm:$0xff]
  %v395 = vld [vmem:[%s1 + $0xe8] sm:$0xff]
  %v396 = vld [vmem:[%s1 + $0xf0] sm:$0xff]
  %v397 = vld [vmem:[%s1 + $0xf8] sm:$0xff]
  %v398 = vld [vmem:[%s1 + $0x100] sm:$0xff]
  %v399 = vld [vmem:[%s1 + $0x108] sm:$0xff]
  %v400 = vld [vmem:[%s1 + $0x110] sm:$0xff]
  %v401 = vld [vmem:[%s1 + $0x118] sm:$0xff]
  %v402 = vld [vmem:[%s1 + $0x120] sm:$0xff]
  %v403 = vld [vmem:[%s1 + $0x128] sm:$0xff]
  %v404 = vld [vmem:[%s1 + $0x130] sm:$0xff]
  %v405 = vld [vmem:[%s1 + $0x138] sm:$0xff]
  %v406 = vld [vmem:[%s1 + $0x140] sm:$0xff]
  %v407 = vld [vmem:[%s1 + $0x148] sm:$0xff]
  %v408 = vld [vmem:[%s1 + $0x150] sm:$0xff]
  %v409 = vld [vmem:[%s1 + $0x158] sm:$0xff]
  %v410 = vld [vmem:[%s1 + $0x160] sm:$0xff]
  %v411 = vld [vmem:[%s1 + $0x168] sm:$0xff]
  %v412 = vld [vmem:[%s1 + $0x170] sm:$0xff]
  %v413 = vld [vmem:[%s1 + $0x178] sm:$0xff]
  %v414 = vld [vmem:[%s1 + $0x180] sm:$0xff]
  %v415 = vld [vmem:[%s1 + $0x188] sm:$0xff]
  %v416 = vld [vmem:[%s1 + $0x190] sm:$0xff]
  %v417 = vld [vmem:[%s1 + $0x198] sm:$0xff]
  %v418 = vld [vmem:[%s1 + $0x1a0] sm:$0xff]
  %v419 = vld [vmem:[%s1 + $0x1a8] sm:$0xff]
  %v420 = vld [vmem:[%s1 + $0x1b0] sm:$0xff]
  %v421 = vld [vmem:[%s1 + $0x1b8] sm:$0xff]
  %v422 = vld [vmem:[%s1 + $0x1c0] sm:$0xff]
  %v423 = vld [vmem:[%s1 + $0x1c8] sm:$0xff]
  %v424 = vld [vmem:[%s1 + $0x1d0] sm:$0xff]
  %v425 = vld [vmem:[%s1 + $0x1d8] sm:$0xff]
  %v426 = vld [vmem:[%s1 + $0x1e0] sm:$0xff]
  %v427 = vld [vmem:[%s1 + $0x1e8] sm:$0xff]
  %v428 = vld [vmem:[%s1 + $0x1f0] sm:$0xff]
  %v429 = vld [vmem:[%s1 + $0x1f8] sm:$0xff]
  %v430 = vld [vmem:[%s1 + $0x200] sm:$0xff]
  %v431 = vld [vmem:[%s1 + $0x208] sm:$0xff]
  %v432 = vld [vmem:[%s1 + $0x210] sm:$0xff]
  %v433 = vld [vmem:[%s1 + $0x218] sm:$0xff]
  %v434 = vld [vmem:[%s1 + $0x220] sm:$0xff]
  %v435 = vld [vmem:[%s1 + $0x228] sm:$0xff]
  %v436 = vld [vmem:[%s1 + $0x230] sm:$0xff]
  %v437 = vld [vmem:[%s1 + $0x238] sm:$0xff]
  %v438 = vld [vmem:[%s1 + $0x240] sm:$0xff]
  %v439 = vld [vmem:[%s1 + $0x248] sm:$0xff]
  %v440 = vld [vmem:[%s1 + $0x250] sm:$0xff]
  %v441 = vld [vmem:[%s1 + $0x258] sm:$0xff]
  %v442 = vld [vmem:[%s1 + $0x260] sm:$0xff]
  %v443 = vld [vmem:[%s1 + $0x268] sm:$0xff]
  %v444 = vld [vmem:[%s1 + $0x270] sm:$0xff]
  %v445 = vld [vmem:[%s1 + $0x278] sm:$0xff]
  %v446 = vld [vmem:[%s1 + $0x280] sm:$0xff]
  %v447 = vld [vmem:[%s1 + $0x288] sm:$0xff]
  %v448 = vld [vmem:[%s1 + $0x290] sm:$0xff]
  %v449 = vld [vmem:[%s1 + $0x298] sm:$0xff]
  %v450 = vld [vmem:[%s1 + $0x2a0] sm:$0xff]
  %v451 = vld [vmem:[%s1 + $0x2a8] sm:$0xff]
  %v452 = vld [vmem:[%s1 + $0x2b0] sm:$0xff]
  %v453 = vld [vmem:[%s1 + $0x2b8] sm:$0xff]
  %v454 = vld [vmem:[%s1 + $0x2c0] sm:$0xff]
  %v455 = vld [vmem:[%s1 + $0x2c8] sm:$0xff]
  %v456 = vld [vmem:[%s1 + $0x2d0] sm:$0xff]
  %v457 = vld [vmem:[%s1 + $0x2d8] sm:$0xff]
  %v458 = vld [vmem:[%s1 + $0x2e0] sm:$0xff]
  %v459 = vld [vmem:[%s1 + $0x2e8] sm:$0xff]
  %v460 = vld [vmem:[%s1 + $0x2f0] sm:$0xff]
  %v461 = vld [vmem:[%s1 + $0x2f8] sm:$0xff]
  %v462 = vld [vmem:[%s1 + $0x300] sm:$0xff]
  %v463 = vld [vmem:[%s1 + $0x308] sm:$0xff]
  %v464 = vld [vmem:[%s1 + $0x310] sm:$0xff]
  %v465 = vld [vmem:[%s1 + $0x318] sm:$0xff]
  %v466 = vld [vmem:[%s1 + $0x320] sm:$0xff]
  %v467 = vld [vmem:[%s1 + $0x328] sm:$0xff]
  %v468 = vld [vmem:[%s1 + $0x330] sm:$0xff]
  %v469 = vld [vmem:[%s1 + $0x338] sm:$0xff]
  %v470 = vld [vmem:[%s1 + $0x340] sm:$0xff]
  %v471 = vld [vmem:[%s1 + $0x348] sm:$0xff]
  %v472 = vld [vmem:[%s1 + $0x350] sm:$0xff]
  %v473 = vld [vmem:[%s1 + $0x358] sm:$0xff]
  %v474 = vld [vmem:[%s1 + $0x360] sm:$0xff]
  %v475 = vld [vmem:[%s1 + $0x368] sm:$0xff]
  %v476 = vld [vmem:[%s1 + $0x370] sm:$0xff]
  %v477 = vld [vmem:[%s1 + $0x378] sm:$0xff]
  %v478 = vld [vmem:[%s1 + $0x380] sm:$0xff]
  %v479 = vld [vmem:[%s1 + $0x388] sm:$0xff]
  %v480 = vld [vmem:[%s1 + $0x390] sm:$0xff]
  %v481 = vld [vmem:[%s1 + $0x398] sm:$0xff]
  %v482 = vld [vmem:[%s1 + $0x3a0] sm:$0xff]
  %v483 = vld [vmem:[%s1 + $0x3a8] sm:$0xff]
  %v484 = vld [vmem:[%s1 + $0x3b0] sm:$0xff]
  %v485 = vld [vmem:[%s1 + $0x3b8] sm:$0xff]
  %v486 = vld [vmem:[%s1 + $0x3c0] sm:$0xff]
  %v487 = vld [vmem:[%s1 + $0x3c8] sm:$0xff]
  %v488 = vld [vmem:[%s1 + $0x3d0] sm:$0xff]
  %v489 = vld [vmem:[%s1 + $0x3d8] sm:$0xff]
  %v490 = vld [vmem:[%s1 + $0x3e0] sm:$0xff]
  %v491 = vld [vmem:[%s1 + $0x3e8] sm:$0xff]
  %v492 = vld [vmem:[%s1 + $0x3f0] sm:$0xff]
  %v493 = vld [vmem:[%s1 + $0x3f8] sm:$0xff]
  %v494 = vld [vmem:[%s1 + $0x400] sm:$0xff]
  %v495 = vld [vmem:[%s1 + $0x408] sm:$0xff]
  %v496 = vld [vmem:[%s1 + $0x410] sm:$0xff]
  %v497 = vld [vmem:[%s1 + $0x418] sm:$0xff]
  %v498 = vld [vmem:[%s1 + $0x420] sm:$0xff]
  %v499 = vld [vmem:[%s1 + $0x428] sm:$0xff]
  %v500 = vld [vmem:[%s1 + $0x430] sm:$0xff]
  %v501 = vld [vmem:[%s1 + $0x438] sm:$0xff]
  %v502 = vld [vmem:[%s1 + $0x440] sm:$0xff]
  %v503 = vld [vmem:[%s1 + $0x448] sm:$0xff]
  %v504 = vld [vmem:[%s1 + $0x450] sm:$0xff]
  %v505 = vld [vmem:[%s1 + $0x458] sm:$0xff]
  %v506 = vld [vmem:[%s1 + $0x460] sm:$0xff]
  %v507 = vld [vmem:[%s1 + $0x468] sm:$0xff]
  %v508 = vld [vmem:[%s1 + $0x470] sm:$0xff]
  %v509 = vld [vmem:[%s1 + $0x478] sm:$0xff]
  %v510 = vld [vmem:[%s1 + $0x480] sm:$0xff]
  %v511 = vld [vmem:[%s1 + $0x488] sm:$0xff]
  %v512 = vld [vmem:[%s1 + $0x490] sm:$0xff]
  %v513 = vld [vmem:[%s1 + $0x498] sm:$0xff]
  %v514 = vld [vmem:[%s1 + $0x4a0] sm:$0xff]
  %v515 = vld [vmem:[%s1 + $0x4a8] sm:$0xff]
  %v516 = vld [vmem:[%s1 + $0x4b0] sm:$0xff]
  %v517 = vld [vmem:[%s1 + $0x4b8] sm:$0xff]
  %v518 = vld [vmem:[%s1 + $0x4c0] sm:$0xff]
  %v519 = vld [vmem:[%s1 + $0x4c8] sm:$0xff]
  %v520 = vld [vmem:[%s1 + $0x4d0] sm:$0xff]
  %v521 = vld [vmem:[%s1 + $0x4d8] sm:$0xff]
  %v522 = vld [vmem:[%s1 + $0x4e0] sm:$0xff]
  %v523 = vld [vmem:[%s1 + $0x4e8] sm:$0xff]
  %v524 = vld [vmem:[%s1 + $0x4f0] sm:$0xff]
  %v525 = vld [vmem:[%s1 + $0x4f8] sm:$0xff]
  %v526 = vld [vmem:[%s1 + $0x500] sm:$0xff]
  %v527 = vld [vmem:[%s1 + $0x508] sm:$0xff]
  %v528 = vld [vmem:[%s1 + $0x510] sm:$0xff]
  %v529 = vld [vmem:[%s1 + $0x518] sm:$0xff]
  %v530 = vld [vmem:[%s1 + $0x520] sm:$0xff]
  %v531 = vld [vmem:[%s1 + $0x528] sm:$0xff]
  %v532 = vld [vmem:[%s1 + $0x530] sm:$0xff]
  %v533 = vld [vmem:[%s1 + $0x538] sm:$0xff]
  %v534 = vld [vmem:[%s1 + $0x540] sm:$0xff]
  %v535 = vld [vmem:[%s1 + $0x548] sm:$0xff]
  %v536 = vld [vmem:[%s1 + $0x550] sm:$0xff]
  %v537 = vld [vmem:[%s1 + $0x558] sm:$0xff]
  %v538 = vld [vmem:[%s1 + $0x560] sm:$0xff]
  %v539 = vld [vmem:[%s1 + $0x568] sm:$0xff]
  %v540 = vld [vmem:[%s1 + $0x570] sm:$0xff]
  %v541 = vld [vmem:[%s1 + $0x578] sm:$0xff]
  %v542 = vld [vmem:[%s1 + $0x580] sm:$0xff]
  %v543 = vld [vmem:[%s1 + $0x588] sm:$0xff]
  %v544 = vld [vmem:[%s1 + $0x590] sm:$0xff]
  %v545 = vld [vmem:[%s1 + $0x598] sm:$0xff]
  %v546 = vld [vmem:[%s1 + $0x5a0] sm:$0xff]
  %v547 = vld [vmem:[%s1 + $0x5a8] sm:$0xff]
  %v548 = vld [vmem:[%s1 + $0x5b0] sm:$0xff]
  %v549 = vld [vmem:[%s1 + $0x5b8] sm:$0xff]
  %v550 = vld [vmem:[%s1 + $0x5c0] sm:$0xff]
  %v551 = vld [vmem:[%s1 + $0x5c8] sm:$0xff]
  %v552 = vld [vmem:[%s1 + $0x5d0] sm:$0xff]
  %v553 = vld [vmem:[%s1 + $0x5d8] sm:$0xff]
  %v554 = vld [vmem:[%s1 + $0x5e0] sm:$0xff]
  %v555 = vld [vmem:[%s1 + $0x5e8] sm:$0xff]
  %v556 = vld [vmem:[%s1 + $0x5f0] sm:$0xff]
  %v557 = vld [vmem:[%s1 + $0x5f8] sm:$0xff]
  %v558 = vld [vmem:[%s1 + $0x600] sm:$0xff]
  %v559 = vld [vmem:[%s1 + $0x608] sm:$0xff]
  %v560 = vld [vmem:[%s1 + $0x610] sm:$0xff]
  %v561 = vld [vmem:[%s1 + $0x618] sm:$0xff]
  %v562 = vld [vmem:[%s1 + $0x620] sm:$0xff]
  %v563 = vld [vmem:[%s1 + $0x628] sm:$0xff]
  %v564 = vld [vmem:[%s1 + $0x630] sm:$0xff]
  %v565 = vld [vmem:[%s1 + $0x638] sm:$0xff]
  %v566 = vld [vmem:[%s1 + $0x640] sm:$0xff]
  %v567 = vld [vmem:[%s1 + $0x648] sm:$0xff]
  %v568 = vld [vmem:[%s1 + $0x650] sm:$0xff]
  %v569 = vld [vmem:[%s1 + $0x658] sm:$0xff]
  %v570 = vld [vmem:[%s1 + $0x660] sm:$0xff]
  %v571 = vld [vmem:[%s1 + $0x668] sm:$0xff]
  %v572 = vld [vmem:[%s1 + $0x670] sm:$0xff]
  %v573 = vld [vmem:[%s1 + $0x678] sm:$0xff]
  %v574 = vld [vmem:[%s1 + $0x680] sm:$0xff]
  %v575 = vld [vmem:[%s1 + $0x688] sm:$0xff]
  %v576 = vld [vmem:[%s1 + $0x690] sm:$0xff]
  %v577 = vld [vmem:[%s1 + $0x698] sm:$0xff]
  %v578 = vld [vmem:[%s1 + $0x6a0] sm:$0xff]
  %v579 = vld [vmem:[%s1 + $0x6a8] sm:$0xff]
  %v580 = vld [vmem:[%s1 + $0x6b0] sm:$0xff]
  %v581 = vld [vmem:[%s1 + $0x6b8] sm:$0xff]
  %v582 = vld [vmem:[%s1 + $0x6c0] sm:$0xff]
  %v583 = vld [vmem:[%s1 + $0x6c8] sm:$0xff]
  %v584 = vld [vmem:[%s1 + $0x6d0] sm:$0xff]
  %v585 = vld [vmem:[%s1 + $0x6d8] sm:$0xff]
  %v586 = vld [vmem:[%s1 + $0x6e0] sm:$0xff]
  %v587 = vld [vmem:[%s1 + $0x6e8] sm:$0xff]
  %v588 = vld [vmem:[%s1 + $0x6f0] sm:$0xff]
  %v589 = vld [vmem:[%s1 + $0x6f8] sm:$0xff]
  %v590 = vld [vmem:[%s1 + $0x700] sm:$0xff]
  %v591 = vld [vmem:[%s1 + $0x708] sm:$0xff]
  %v592 = vld [vmem:[%s1 + $0x710] sm:$0xff]
  %v593 = vld [vmem:[%s1 + $0x718] sm:$0xff]
  %v594 = vld [vmem:[%s1 + $0x720] sm:$0xff]
  %v595 = vld [vmem:[%s1 + $0x728] sm:$0xff]
  %v596 = vld [vmem:[%s1 + $0x730] sm:$0xff]
  %v597 = vld [vmem:[%s1 + $0x738] sm:$0xff]
  %v598 = vld [vmem:[%s1 + $0x740] sm:$0xff]
  %v599 = vld [vmem:[%s1 + $0x748] sm:$0xff]
  %v600 = vld [vmem:[%s1 + $0x750] sm:$0xff]
  %v601 = vld [vmem:[%s1 + $0x758] sm:$0xff]
  %v602 = vld [vmem:[%s1 + $0x760] sm:$0xff]
  %v603 = vld [vmem:[%s1 + $0x768] sm:$0xff]
  %v604 = vld [vmem:[%s1 + $0x770] sm:$0xff]
  %v605 = vld [vmem:[%s1 + $0x778] sm:$0xff]
  %v606 = vld [vmem:[%s1 + $0x780] sm:$0xff]
  %v607 = vld [vmem:[%s1 + $0x788] sm:$0xff]
  %v608 = vld [vmem:[%s1 + $0x790] sm:$0xff]
  %v609 = vld [vmem:[%s1 + $0x798] sm:$0xff]
  %v610 = vld [vmem:[%s1 + $0x7a0] sm:$0xff]
  %v611 = vld [vmem:[%s1 + $0x7a8] sm:$0xff]
  %v612 = vld [vmem:[%s1 + $0x7b0] sm:$0xff]
  %v613 = vld [vmem:[%s1 + $0x7b8] sm:$0xff]
  %v614 = vld [vmem:[%s1 + $0x7c0] sm:$0xff]
  %v615 = vld [vmem:[%s1 + $0x7c8] sm:$0xff]
  %v616 = vld [vmem:[%s1 + $0x7d0] sm:$0xff]
  %v617 = vld [vmem:[%s1 + $0x7d8] sm:$0xff]
  %v618 = vld [vmem:[%s1 + $0x7e0] sm:$0xff]
  %v619 = vld [vmem:[%s1 + $0x7e8] sm:$0xff]
  %v620 = vld [vmem:[%s1 + $0x7f0] sm:$0xff]
  %v621 = vld [vmem:[%s1 + $0x7f8] sm:$0xff]
  %v622 = vld [vmem:[%s2] sm:$0x3]
  %v624 = vlaneseq
  %v625 = vshrl.u32 %v624, 7
  %v626 = vsub.s32 0, %v625
  %v627 = vrot.slane %v622, %v626
  %v628 = vlaneseq
  %v629 = vshrl.u32 %v628, 7
  %v630 = vsub.s32 1, %v629
  %v631 = vrot.slane %v622, %v630
  %v666 = vunpack.c.l.b16 %v334
  %v667 = vunpack.c.l.b16 %v335
  %v668 = vunpack.c.l.b16 %v336
  %v669 = vunpack.c.l.b16 %v337
  %v670 = vunpack.c.l.b16 %v338
  %v671 = vunpack.c.l.b16 %v339
  %v672 = vunpack.c.l.b16 %v340
  %v673 = vunpack.c.l.b16 %v341
  %v674 = vunpack.c.l.b16 %v342
  %v675 = vunpack.c.l.b16 %v343
  %v676 = vunpack.c.l.b16 %v344
  %v677 = vunpack.c.l.b16 %v345
  %v678 = vunpack.c.l.b16 %v346
  %v679 = vunpack.c.l.b16 %v347
  %v680 = vunpack.c.l.b16 %v348
  %v681 = vunpack.c.l.b16 %v349
  %v682 = vunpack.c.l.b16 %v350
  %v683 = vunpack.c.l.b16 %v351
  %v684 = vunpack.c.l.b16 %v352
  %v685 = vunpack.c.l.b16 %v353
  %v686 = vunpack.c.l.b16 %v354
  %v687 = vunpack.c.l.b16 %v355
  %v688 = vunpack.c.l.b16 %v356
  %v689 = vunpack.c.l.b16 %v357
  %v690 = vunpack.c.l.b16 %v358
  %v691 = vunpack.c.l.b16 %v359
  %v692 = vunpack.c.l.b16 %v360
  %v693 = vunpack.c.l.b16 %v361
  %v694 = vunpack.c.l.b16 %v362
  %v695 = vunpack.c.l.b16 %v363
  %v696 = vunpack.c.l.b16 %v364
  %v697 = vunpack.c.l.b16 %v365
  %vm698 = vcmask 1041409
  %v699 = vsel %vm698, %v682, %v666
  %v700 = vsel %vm698, %v683, %v667
  %v701 = vsel %vm698, %v684, %v668
  %v702 = vsel %vm698, %v685, %v669
  %v703 = vsel %vm698, %v686, %v670
  %v704 = vsel %vm698, %v687, %v671
  %v705 = vsel %vm698, %v688, %v672
  %v706 = vsel %vm698, %v689, %v673
  %v707 = vsel %vm698, %v690, %v674
  %v708 = vsel %vm698, %v691, %v675
  %v709 = vsel %vm698, %v692, %v676
  %v710 = vsel %vm698, %v693, %v677
  %v711 = vsel %vm698, %v694, %v678
  %v712 = vsel %vm698, %v695, %v679
  %v713 = vsel %vm698, %v696, %v680
  %v714 = vsel %vm698, %v697, %v681
  %v715 = vpack.c.b16 %v699, %v699
  %v716 = vpack.c.b16 %v700, %v700
  %v717 = vpack.c.b16 %v701, %v701
  %v718 = vpack.c.b16 %v702, %v702
  %v719 = vpack.c.b16 %v703, %v703
  %v720 = vpack.c.b16 %v704, %v704
  %v721 = vpack.c.b16 %v705, %v705
  %v722 = vpack.c.b16 %v706, %v706
  %v723 = vpack.c.b16 %v707, %v707
  %v724 = vpack.c.b16 %v708, %v708
  %v725 = vpack.c.b16 %v709, %v709
  %v726 = vpack.c.b16 %v710, %v710
  %v727 = vpack.c.b16 %v711, %v711
  %v728 = vpack.c.b16 %v712, %v712
  %v729 = vpack.c.b16 %v713, %v713
  %v730 = vpack.c.b16 %v714, %v714
  %v1003 = vunpack.c.l.b16 %v366
  %v1004 = vunpack.c.h.b16 %v366
  %v1005 = vunpack.c.l.b16 %v367
  %v1006 = vunpack.c.h.b16 %v367
  %v1007 = vunpack.c.l.b16 %v368
  %v1008 = vunpack.c.h.b16 %v368
  %v1009 = vunpack.c.l.b16 %v369
  %v1010 = vunpack.c.h.b16 %v369
  %v1011 = vunpack.c.l.b16 %v370
  %v1012 = vunpack.c.h.b16 %v370
  %v1013 = vunpack.c.l.b16 %v371
  %v1014 = vunpack.c.h.b16 %v371
  %v1015 = vunpack.c.l.b16 %v372
  %v1016 = vunpack.c.h.b16 %v372
  %v1017 = vunpack.c.l.b16 %v373
  %v1018 = vunpack.c.h.b16 %v373
  %v1019 = vunpack.c.l.b16 %v374
  %v1020 = vunpack.c.h.b16 %v374
  %v1021 = vunpack.c.l.b16 %v375
  %v1022 = vunpack.c.h.b16 %v375
  %v1023 = vunpack.c.l.b16 %v376
  %v1024 = vunpack.c.h.b16 %v376
  %v1025 = vunpack.c.l.b16 %v377
  %v1026 = vunpack.c.h.b16 %v377
  %v1027 = vunpack.c.l.b16 %v378
  %v1028 = vunpack.c.h.b16 %v378
  %v1029 = vunpack.c.l.b16 %v379
  %v1030 = vunpack.c.h.b16 %v379
  %v1031 = vunpack.c.l.b16 %v380
  %v1032 = vunpack.c.h.b16 %v380
  %v1033 = vunpack.c.l.b16 %v381
  %v1034 = vunpack.c.h.b16 %v381
  %v1035 = vunpack.c.l.b16 %v382
  %v1036 = vunpack.c.h.b16 %v382
  %v1037 = vunpack.c.l.b16 %v383
  %v1038 = vunpack.c.h.b16 %v383
  %v1039 = vunpack.c.l.b16 %v384
  %v1040 = vunpack.c.h.b16 %v384
  %v1041 = vunpack.c.l.b16 %v385
  %v1042 = vunpack.c.h.b16 %v385
  %v1043 = vunpack.c.l.b16 %v386
  %v1044 = vunpack.c.h.b16 %v386
  %v1045 = vunpack.c.l.b16 %v387
  %v1046 = vunpack.c.h.b16 %v387
  %v1047 = vunpack.c.l.b16 %v388
  %v1048 = vunpack.c.h.b16 %v388
  %v1049 = vunpack.c.l.b16 %v389
  %v1050 = vunpack.c.h.b16 %v389
  %v1051 = vunpack.c.l.b16 %v390
  %v1052 = vunpack.c.h.b16 %v390
  %v1053 = vunpack.c.l.b16 %v391
  %v1054 = vunpack.c.h.b16 %v391
  %v1055 = vunpack.c.l.b16 %v392
  %v1056 = vunpack.c.h.b16 %v392
  %v1057 = vunpack.c.l.b16 %v393
  %v1058 = vunpack.c.h.b16 %v393
  %v1059 = vunpack.c.l.b16 %v394
  %v1060 = vunpack.c.h.b16 %v394
  %v1061 = vunpack.c.l.b16 %v395
  %v1062 = vunpack.c.h.b16 %v395
  %v1063 = vunpack.c.l.b16 %v396
  %v1064 = vunpack.c.h.b16 %v396
  %v1065 = vunpack.c.l.b16 %v397
  %v1066 = vunpack.c.h.b16 %v397
  %v1067 = vunpack.c.l.b16 %v398
  %v1068 = vunpack.c.h.b16 %v398
  %v1069 = vunpack.c.l.b16 %v399
  %v1070 = vunpack.c.h.b16 %v399
  %v1071 = vunpack.c.l.b16 %v400
  %v1072 = vunpack.c.h.b16 %v400
  %v1073 = vunpack.c.l.b16 %v401
  %v1074 = vunpack.c.h.b16 %v401
  %v1075 = vunpack.c.l.b16 %v402
  %v1076 = vunpack.c.h.b16 %v402
  %v1077 = vunpack.c.l.b16 %v403
  %v1078 = vunpack.c.h.b16 %v403
  %v1079 = vunpack.c.l.b16 %v404
  %v1080 = vunpack.c.h.b16 %v404
  %v1081 = vunpack.c.l.b16 %v405
  %v1082 = vunpack.c.h.b16 %v405
  %v1083 = vunpack.c.l.b16 %v406
  %v1084 = vunpack.c.h.b16 %v406
  %v1085 = vunpack.c.l.b16 %v407
  %v1086 = vunpack.c.h.b16 %v407
  %v1087 = vunpack.c.l.b16 %v408
  %v1088 = vunpack.c.h.b16 %v408
  %v1089 = vunpack.c.l.b16 %v409
  %v1090 = vunpack.c.h.b16 %v409
  %v1091 = vunpack.c.l.b16 %v410
  %v1092 = vunpack.c.h.b16 %v410
  %v1093 = vunpack.c.l.b16 %v411
  %v1094 = vunpack.c.h.b16 %v411
  %v1095 = vunpack.c.l.b16 %v412
  %v1096 = vunpack.c.h.b16 %v412
  %v1097 = vunpack.c.l.b16 %v413
  %v1098 = vunpack.c.h.b16 %v413
  %v1099 = vunpack.c.l.b16 %v414
  %v1100 = vunpack.c.h.b16 %v414
  %v1101 = vunpack.c.l.b16 %v415
  %v1102 = vunpack.c.h.b16 %v415
  %v1103 = vunpack.c.l.b16 %v416
  %v1104 = vunpack.c.h.b16 %v416
  %v1105 = vunpack.c.l.b16 %v417
  %v1106 = vunpack.c.h.b16 %v417
  %v1107 = vunpack.c.l.b16 %v418
  %v1108 = vunpack.c.h.b16 %v418
  %v1109 = vunpack.c.l.b16 %v419
  %v1110 = vunpack.c.h.b16 %v419
  %v1111 = vunpack.c.l.b16 %v420
  %v1112 = vunpack.c.h.b16 %v420
  %v1113 = vunpack.c.l.b16 %v421
  %v1114 = vunpack.c.h.b16 %v421
  %v1115 = vunpack.c.l.b16 %v422
  %v1116 = vunpack.c.h.b16 %v422
  %v1117 = vunpack.c.l.b16 %v423
  %v1118 = vunpack.c.h.b16 %v423
  %v1119 = vunpack.c.l.b16 %v424
  %v1120 = vunpack.c.h.b16 %v424
  %v1121 = vunpack.c.l.b16 %v425
  %v1122 = vunpack.c.h.b16 %v425
  %v1123 = vunpack.c.l.b16 %v426
  %v1124 = vunpack.c.h.b16 %v426
  %v1125 = vunpack.c.l.b16 %v427
  %v1126 = vunpack.c.h.b16 %v427
  %v1127 = vunpack.c.l.b16 %v428
  %v1128 = vunpack.c.h.b16 %v428
  %v1129 = vunpack.c.l.b16 %v429
  %v1130 = vunpack.c.h.b16 %v429
  %v1131 = vunpack.c.l.b16 %v430
  %v1132 = vunpack.c.h.b16 %v430
  %v1133 = vunpack.c.l.b16 %v431
  %v1134 = vunpack.c.h.b16 %v431
  %v1135 = vunpack.c.l.b16 %v432
  %v1136 = vunpack.c.h.b16 %v432
  %v1137 = vunpack.c.l.b16 %v433
  %v1138 = vunpack.c.h.b16 %v433
  %v1139 = vunpack.c.l.b16 %v434
  %v1140 = vunpack.c.h.b16 %v434
  %v1141 = vunpack.c.l.b16 %v435
  %v1142 = vunpack.c.h.b16 %v435
  %v1143 = vunpack.c.l.b16 %v436
  %v1144 = vunpack.c.h.b16 %v436
  %v1145 = vunpack.c.l.b16 %v437
  %v1146 = vunpack.c.h.b16 %v437
  %v1147 = vunpack.c.l.b16 %v438
  %v1148 = vunpack.c.h.b16 %v438
  %v1149 = vunpack.c.l.b16 %v439
  %v1150 = vunpack.c.h.b16 %v439
  %v1151 = vunpack.c.l.b16 %v440
  %v1152 = vunpack.c.h.b16 %v440
  %v1153 = vunpack.c.l.b16 %v441
  %v1154 = vunpack.c.h.b16 %v441
  %v1155 = vunpack.c.l.b16 %v442
  %v1156 = vunpack.c.h.b16 %v442
  %v1157 = vunpack.c.l.b16 %v443
  %v1158 = vunpack.c.h.b16 %v443
  %v1159 = vunpack.c.l.b16 %v444
  %v1160 = vunpack.c.h.b16 %v444
  %v1161 = vunpack.c.l.b16 %v445
  %v1162 = vunpack.c.h.b16 %v445
  %v1163 = vunpack.c.l.b16 %v446
  %v1164 = vunpack.c.h.b16 %v446
  %v1165 = vunpack.c.l.b16 %v447
  %v1166 = vunpack.c.h.b16 %v447
  %v1167 = vunpack.c.l.b16 %v448
  %v1168 = vunpack.c.h.b16 %v448
  %v1169 = vunpack.c.l.b16 %v449
  %v1170 = vunpack.c.h.b16 %v449
  %v1171 = vunpack.c.l.b16 %v450
  %v1172 = vunpack.c.h.b16 %v450
  %v1173 = vunpack.c.l.b16 %v451
  %v1174 = vunpack.c.h.b16 %v451
  %v1175 = vunpack.c.l.b16 %v452
  %v1176 = vunpack.c.h.b16 %v452
  %v1177 = vunpack.c.l.b16 %v453
  %v1178 = vunpack.c.h.b16 %v453
  %v1179 = vunpack.c.l.b16 %v454
  %v1180 = vunpack.c.h.b16 %v454
  %v1181 = vunpack.c.l.b16 %v455
  %v1182 = vunpack.c.h.b16 %v455
  %v1183 = vunpack.c.l.b16 %v456
  %v1184 = vunpack.c.h.b16 %v456
  %v1185 = vunpack.c.l.b16 %v457
  %v1186 = vunpack.c.h.b16 %v457
  %v1187 = vunpack.c.l.b16 %v458
  %v1188 = vunpack.c.h.b16 %v458
  %v1189 = vunpack.c.l.b16 %v459
  %v1190 = vunpack.c.h.b16 %v459
  %v1191 = vunpack.c.l.b16 %v460
  %v1192 = vunpack.c.h.b16 %v460
  %v1193 = vunpack.c.l.b16 %v461
  %v1194 = vunpack.c.h.b16 %v461
  %v1195 = vunpack.c.l.b16 %v462
  %v1196 = vunpack.c.h.b16 %v462
  %v1197 = vunpack.c.l.b16 %v463
  %v1198 = vunpack.c.h.b16 %v463
  %v1199 = vunpack.c.l.b16 %v464
  %v1200 = vunpack.c.h.b16 %v464
  %v1201 = vunpack.c.l.b16 %v465
  %v1202 = vunpack.c.h.b16 %v465
  %v1203 = vunpack.c.l.b16 %v466
  %v1204 = vunpack.c.h.b16 %v466
  %v1205 = vunpack.c.l.b16 %v467
  %v1206 = vunpack.c.h.b16 %v467
  %v1207 = vunpack.c.l.b16 %v468
  %v1208 = vunpack.c.h.b16 %v468
  %v1209 = vunpack.c.l.b16 %v469
  %v1210 = vunpack.c.h.b16 %v469
  %v1211 = vunpack.c.l.b16 %v470
  %v1212 = vunpack.c.h.b16 %v470
  %v1213 = vunpack.c.l.b16 %v471
  %v1214 = vunpack.c.h.b16 %v471
  %v1215 = vunpack.c.l.b16 %v472
  %v1216 = vunpack.c.h.b16 %v472
  %v1217 = vunpack.c.l.b16 %v473
  %v1218 = vunpack.c.h.b16 %v473
  %v1219 = vunpack.c.l.b16 %v474
  %v1220 = vunpack.c.h.b16 %v474
  %v1221 = vunpack.c.l.b16 %v475
  %v1222 = vunpack.c.h.b16 %v475
  %v1223 = vunpack.c.l.b16 %v476
  %v1224 = vunpack.c.h.b16 %v476
  %v1225 = vunpack.c.l.b16 %v477
  %v1226 = vunpack.c.h.b16 %v477
  %v1227 = vunpack.c.l.b16 %v478
  %v1228 = vunpack.c.h.b16 %v478
  %v1229 = vunpack.c.l.b16 %v479
  %v1230 = vunpack.c.h.b16 %v479
  %v1231 = vunpack.c.l.b16 %v480
  %v1232 = vunpack.c.h.b16 %v480
  %v1233 = vunpack.c.l.b16 %v481
  %v1234 = vunpack.c.h.b16 %v481
  %v1235 = vunpack.c.l.b16 %v482
  %v1236 = vunpack.c.h.b16 %v482
  %v1237 = vunpack.c.l.b16 %v483
  %v1238 = vunpack.c.h.b16 %v483
  %v1239 = vunpack.c.l.b16 %v484
  %v1240 = vunpack.c.h.b16 %v484
  %v1241 = vunpack.c.l.b16 %v485
  %v1242 = vunpack.c.h.b16 %v485
  %v1243 = vunpack.c.l.b16 %v486
  %v1244 = vunpack.c.h.b16 %v486
  %v1245 = vunpack.c.l.b16 %v487
  %v1246 = vunpack.c.h.b16 %v487
  %v1247 = vunpack.c.l.b16 %v488
  %v1248 = vunpack.c.h.b16 %v488
  %v1249 = vunpack.c.l.b16 %v489
  %v1250 = vunpack.c.h.b16 %v489
  %v1251 = vunpack.c.l.b16 %v490
  %v1252 = vunpack.c.h.b16 %v490
  %v1253 = vunpack.c.l.b16 %v491
  %v1254 = vunpack.c.h.b16 %v491
  %v1255 = vunpack.c.l.b16 %v492
  %v1256 = vunpack.c.h.b16 %v492
  %v1257 = vunpack.c.l.b16 %v493
  %v1258 = vunpack.c.h.b16 %v493
  %v1259 = vunpack.c.l.b16 %v494
  %v1260 = vunpack.c.h.b16 %v494
  %v1261 = vunpack.c.l.b16 %v495
  %v1262 = vunpack.c.h.b16 %v495
  %v1263 = vunpack.c.l.b16 %v496
  %v1264 = vunpack.c.h.b16 %v496
  %v1265 = vunpack.c.l.b16 %v497
  %v1266 = vunpack.c.h.b16 %v497
  %v1267 = vunpack.c.l.b16 %v498
  %v1268 = vunpack.c.h.b16 %v498
  %v1269 = vunpack.c.l.b16 %v499
  %v1270 = vunpack.c.h.b16 %v499
  %v1271 = vunpack.c.l.b16 %v500
  %v1272 = vunpack.c.h.b16 %v500
  %v1273 = vunpack.c.l.b16 %v501
  %v1274 = vunpack.c.h.b16 %v501
  %v1275 = vunpack.c.l.b16 %v502
  %v1276 = vunpack.c.h.b16 %v502
  %v1277 = vunpack.c.l.b16 %v503
  %v1278 = vunpack.c.h.b16 %v503
  %v1279 = vunpack.c.l.b16 %v504
  %v1280 = vunpack.c.h.b16 %v504
  %v1281 = vunpack.c.l.b16 %v505
  %v1282 = vunpack.c.h.b16 %v505
  %v1283 = vunpack.c.l.b16 %v506
  %v1284 = vunpack.c.h.b16 %v506
  %v1285 = vunpack.c.l.b16 %v507
  %v1286 = vunpack.c.h.b16 %v507
  %v1287 = vunpack.c.l.b16 %v508
  %v1288 = vunpack.c.h.b16 %v508
  %v1289 = vunpack.c.l.b16 %v509
  %v1290 = vunpack.c.h.b16 %v509
  %v1291 = vunpack.c.l.b16 %v510
  %v1292 = vunpack.c.h.b16 %v510
  %v1293 = vunpack.c.l.b16 %v511
  %v1294 = vunpack.c.h.b16 %v511
  %v1295 = vunpack.c.l.b16 %v512
  %v1296 = vunpack.c.h.b16 %v512
  %v1297 = vunpack.c.l.b16 %v513
  %v1298 = vunpack.c.h.b16 %v513
  %v1299 = vunpack.c.l.b16 %v514
  %v1300 = vunpack.c.h.b16 %v514
  %v1301 = vunpack.c.l.b16 %v515
  %v1302 = vunpack.c.h.b16 %v515
  %v1303 = vunpack.c.l.b16 %v516
  %v1304 = vunpack.c.h.b16 %v516
  %v1305 = vunpack.c.l.b16 %v517
  %v1306 = vunpack.c.h.b16 %v517
  %v1307 = vunpack.c.l.b16 %v518
  %v1308 = vunpack.c.h.b16 %v518
  %v1309 = vunpack.c.l.b16 %v519
  %v1310 = vunpack.c.h.b16 %v519
  %v1311 = vunpack.c.l.b16 %v520
  %v1312 = vunpack.c.h.b16 %v520
  %v1313 = vunpack.c.l.b16 %v521
  %v1314 = vunpack.c.h.b16 %v521
  %v1315 = vunpack.c.l.b16 %v522
  %v1316 = vunpack.c.h.b16 %v522
  %v1317 = vunpack.c.l.b16 %v523
  %v1318 = vunpack.c.h.b16 %v523
  %v1319 = vunpack.c.l.b16 %v524
  %v1320 = vunpack.c.h.b16 %v524
  %v1321 = vunpack.c.l.b16 %v525
  %v1322 = vunpack.c.h.b16 %v525
  %v1323 = vunpack.c.l.b16 %v526
  %v1324 = vunpack.c.h.b16 %v526
  %v1325 = vunpack.c.l.b16 %v527
  %v1326 = vunpack.c.h.b16 %v527
  %v1327 = vunpack.c.l.b16 %v528
  %v1328 = vunpack.c.h.b16 %v528
  %v1329 = vunpack.c.l.b16 %v529
  %v1330 = vunpack.c.h.b16 %v529
  %v1331 = vunpack.c.l.b16 %v530
  %v1332 = vunpack.c.h.b16 %v530
  %v1333 = vunpack.c.l.b16 %v531
  %v1334 = vunpack.c.h.b16 %v531
  %v1335 = vunpack.c.l.b16 %v532
  %v1336 = vunpack.c.h.b16 %v532
  %v1337 = vunpack.c.l.b16 %v533
  %v1338 = vunpack.c.h.b16 %v533
  %v1339 = vunpack.c.l.b16 %v534
  %v1340 = vunpack.c.h.b16 %v534
  %v1341 = vunpack.c.l.b16 %v535
  %v1342 = vunpack.c.h.b16 %v535
  %v1343 = vunpack.c.l.b16 %v536
  %v1344 = vunpack.c.h.b16 %v536
  %v1345 = vunpack.c.l.b16 %v537
  %v1346 = vunpack.c.h.b16 %v537
  %v1347 = vunpack.c.l.b16 %v538
  %v1348 = vunpack.c.h.b16 %v538
  %v1349 = vunpack.c.l.b16 %v539
  %v1350 = vunpack.c.h.b16 %v539
  %v1351 = vunpack.c.l.b16 %v540
  %v1352 = vunpack.c.h.b16 %v540
  %v1353 = vunpack.c.l.b16 %v541
  %v1354 = vunpack.c.h.b16 %v541
  %v1355 = vunpack.c.l.b16 %v542
  %v1356 = vunpack.c.h.b16 %v542
  %v1357 = vunpack.c.l.b16 %v543
  %v1358 = vunpack.c.h.b16 %v543
  %v1359 = vunpack.c.l.b16 %v544
  %v1360 = vunpack.c.h.b16 %v544
  %v1361 = vunpack.c.l.b16 %v545
  %v1362 = vunpack.c.h.b16 %v545
  %v1363 = vunpack.c.l.b16 %v546
  %v1364 = vunpack.c.h.b16 %v546
  %v1365 = vunpack.c.l.b16 %v547
  %v1366 = vunpack.c.h.b16 %v547
  %v1367 = vunpack.c.l.b16 %v548
  %v1368 = vunpack.c.h.b16 %v548
  %v1369 = vunpack.c.l.b16 %v549
  %v1370 = vunpack.c.h.b16 %v549
  %v1371 = vunpack.c.l.b16 %v550
  %v1372 = vunpack.c.h.b16 %v550
  %v1373 = vunpack.c.l.b16 %v551
  %v1374 = vunpack.c.h.b16 %v551
  %v1375 = vunpack.c.l.b16 %v552
  %v1376 = vunpack.c.h.b16 %v552
  %v1377 = vunpack.c.l.b16 %v553
  %v1378 = vunpack.c.h.b16 %v553
  %v1379 = vunpack.c.l.b16 %v554
  %v1380 = vunpack.c.h.b16 %v554
  %v1381 = vunpack.c.l.b16 %v555
  %v1382 = vunpack.c.h.b16 %v555
  %v1383 = vunpack.c.l.b16 %v556
  %v1384 = vunpack.c.h.b16 %v556
  %v1385 = vunpack.c.l.b16 %v557
  %v1386 = vunpack.c.h.b16 %v557
  %v1387 = vunpack.c.l.b16 %v558
  %v1388 = vunpack.c.h.b16 %v558
  %v1389 = vunpack.c.l.b16 %v559
  %v1390 = vunpack.c.h.b16 %v559
  %v1391 = vunpack.c.l.b16 %v560
  %v1392 = vunpack.c.h.b16 %v560
  %v1393 = vunpack.c.l.b16 %v561
  %v1394 = vunpack.c.h.b16 %v561
  %v1395 = vunpack.c.l.b16 %v562
  %v1396 = vunpack.c.h.b16 %v562
  %v1397 = vunpack.c.l.b16 %v563
  %v1398 = vunpack.c.h.b16 %v563
  %v1399 = vunpack.c.l.b16 %v564
  %v1400 = vunpack.c.h.b16 %v564
  %v1401 = vunpack.c.l.b16 %v565
  %v1402 = vunpack.c.h.b16 %v565
  %v1403 = vunpack.c.l.b16 %v566
  %v1404 = vunpack.c.h.b16 %v566
  %v1405 = vunpack.c.l.b16 %v567
  %v1406 = vunpack.c.h.b16 %v567
  %v1407 = vunpack.c.l.b16 %v568
  %v1408 = vunpack.c.h.b16 %v568
  %v1409 = vunpack.c.l.b16 %v569
  %v1410 = vunpack.c.h.b16 %v569
  %v1411 = vunpack.c.l.b16 %v570
  %v1412 = vunpack.c.h.b16 %v570
  %v1413 = vunpack.c.l.b16 %v571
  %v1414 = vunpack.c.h.b16 %v571
  %v1415 = vunpack.c.l.b16 %v572
  %v1416 = vunpack.c.h.b16 %v572
  %v1417 = vunpack.c.l.b16 %v573
  %v1418 = vunpack.c.h.b16 %v573
  %v1419 = vunpack.c.l.b16 %v574
  %v1420 = vunpack.c.h.b16 %v574
  %v1421 = vunpack.c.l.b16 %v575
  %v1422 = vunpack.c.h.b16 %v575
  %v1423 = vunpack.c.l.b16 %v576
  %v1424 = vunpack.c.h.b16 %v576
  %v1425 = vunpack.c.l.b16 %v577
  %v1426 = vunpack.c.h.b16 %v577
  %v1427 = vunpack.c.l.b16 %v578
  %v1428 = vunpack.c.h.b16 %v578
  %v1429 = vunpack.c.l.b16 %v579
  %v1430 = vunpack.c.h.b16 %v579
  %v1431 = vunpack.c.l.b16 %v580
  %v1432 = vunpack.c.h.b16 %v580
  %v1433 = vunpack.c.l.b16 %v581
  %v1434 = vunpack.c.h.b16 %v581
  %v1435 = vunpack.c.l.b16 %v582
  %v1436 = vunpack.c.h.b16 %v582
  %v1437 = vunpack.c.l.b16 %v583
  %v1438 = vunpack.c.h.b16 %v583
  %v1439 = vunpack.c.l.b16 %v584
  %v1440 = vunpack.c.h.b16 %v584
  %v1441 = vunpack.c.l.b16 %v585
  %v1442 = vunpack.c.h.b16 %v585
  %v1443 = vunpack.c.l.b16 %v586
  %v1444 = vunpack.c.h.b16 %v586
  %v1445 = vunpack.c.l.b16 %v587
  %v1446 = vunpack.c.h.b16 %v587
  %v1447 = vunpack.c.l.b16 %v588
  %v1448 = vunpack.c.h.b16 %v588
  %v1449 = vunpack.c.l.b16 %v589
  %v1450 = vunpack.c.h.b16 %v589
  %v1451 = vunpack.c.l.b16 %v590
  %v1452 = vunpack.c.h.b16 %v590
  %v1453 = vunpack.c.l.b16 %v591
  %v1454 = vunpack.c.h.b16 %v591
  %v1455 = vunpack.c.l.b16 %v592
  %v1456 = vunpack.c.h.b16 %v592
  %v1457 = vunpack.c.l.b16 %v593
  %v1458 = vunpack.c.h.b16 %v593
  %v1459 = vunpack.c.l.b16 %v594
  %v1460 = vunpack.c.h.b16 %v594
  %v1461 = vunpack.c.l.b16 %v595
  %v1462 = vunpack.c.h.b16 %v595
  %v1463 = vunpack.c.l.b16 %v596
  %v1464 = vunpack.c.h.b16 %v596
  %v1465 = vunpack.c.l.b16 %v597
  %v1466 = vunpack.c.h.b16 %v597
  %v1467 = vunpack.c.l.b16 %v598
  %v1468 = vunpack.c.h.b16 %v598
  %v1469 = vunpack.c.l.b16 %v599
  %v1470 = vunpack.c.h.b16 %v599
  %v1471 = vunpack.c.l.b16 %v600
  %v1472 = vunpack.c.h.b16 %v600
  %v1473 = vunpack.c.l.b16 %v601
  %v1474 = vunpack.c.h.b16 %v601
  %v1475 = vunpack.c.l.b16 %v602
  %v1476 = vunpack.c.h.b16 %v602
  %v1477 = vunpack.c.l.b16 %v603
  %v1478 = vunpack.c.h.b16 %v603
  %v1479 = vunpack.c.l.b16 %v604
  %v1480 = vunpack.c.h.b16 %v604
  %v1481 = vunpack.c.l.b16 %v605
  %v1482 = vunpack.c.h.b16 %v605
  %v1483 = vunpack.c.l.b16 %v606
  %v1484 = vunpack.c.h.b16 %v606
  %v1485 = vunpack.c.l.b16 %v607
  %v1486 = vunpack.c.h.b16 %v607
  %v1487 = vunpack.c.l.b16 %v608
  %v1488 = vunpack.c.h.b16 %v608
  %v1489 = vunpack.c.l.b16 %v609
  %v1490 = vunpack.c.h.b16 %v609
  %v1491 = vunpack.c.l.b16 %v610
  %v1492 = vunpack.c.h.b16 %v610
  %v1493 = vunpack.c.l.b16 %v611
  %v1494 = vunpack.c.h.b16 %v611
  %v1495 = vunpack.c.l.b16 %v612
  %v1496 = vunpack.c.h.b16 %v612
  %v1497 = vunpack.c.l.b16 %v613
  %v1498 = vunpack.c.h.b16 %v613
  %v1499 = vunpack.c.l.b16 %v614
  %v1500 = vunpack.c.h.b16 %v614
  %v1501 = vunpack.c.l.b16 %v615
  %v1502 = vunpack.c.h.b16 %v615
  %v1503 = vunpack.c.l.b16 %v616
  %v1504 = vunpack.c.h.b16 %v616
  %v1505 = vunpack.c.l.b16 %v617
  %v1506 = vunpack.c.h.b16 %v617
  %v1507 = vunpack.c.l.b16 %v618
  %v1508 = vunpack.c.h.b16 %v618
  %v1509 = vunpack.c.l.b16 %v619
  %v1510 = vunpack.c.h.b16 %v619
  %v1511 = vunpack.c.l.b16 %v620
  %v1512 = vunpack.c.h.b16 %v620
  %v1513 = vunpack.c.l.b16 %v621
  %v1514 = vunpack.c.h.b16 %v621
  %v1515 = vpack.c.b16 %v1005, %v1003
  %v1516 = vpack.c.b16 %v1006, %v1004
  %v1517 = vpack.c.b16 %v1009, %v1007
  %v1518 = vpack.c.b16 %v1010, %v1008
  %v1519 = vpack.c.b16 %v1013, %v1011
  %v1520 = vpack.c.b16 %v1014, %v1012
  %v1521 = vpack.c.b16 %v1017, %v1015
  %v1522 = vpack.c.b16 %v1018, %v1016
  %v1523 = vpack.c.b16 %v1021, %v1019
  %v1524 = vpack.c.b16 %v1022, %v1020
  %v1525 = vpack.c.b16 %v1025, %v1023
  %v1526 = vpack.c.b16 %v1026, %v1024
  %v1527 = vpack.c.b16 %v1029, %v1027
  %v1528 = vpack.c.b16 %v1030, %v1028
  %v1529 = vpack.c.b16 %v1033, %v1031
  %v1530 = vpack.c.b16 %v1034, %v1032
  %v1531 = vpack.c.b16 %v1037, %v1035
  %v1532 = vpack.c.b16 %v1038, %v1036
  %v1533 = vpack.c.b16 %v1041, %v1039
  %v1534 = vpack.c.b16 %v1042, %v1040
  %v1535 = vpack.c.b16 %v1045, %v1043
  %v1536 = vpack.c.b16 %v1046, %v1044
  %v1537 = vpack.c.b16 %v1049, %v1047
  %v1538 = vpack.c.b16 %v1050, %v1048
  %v1539 = vpack.c.b16 %v1053, %v1051
  %v1540 = vpack.c.b16 %v1054, %v1052
  %v1541 = vpack.c.b16 %v1057, %v1055
  %v1542 = vpack.c.b16 %v1058, %v1056
  %v1543 = vpack.c.b16 %v1061, %v1059
  %v1544 = vpack.c.b16 %v1062, %v1060
  %v1545 = vpack.c.b16 %v1065, %v1063
  %v1546 = vpack.c.b16 %v1066, %v1064
  %v1547 = vpack.c.b16 %v1069, %v1067
  %v1548 = vpack.c.b16 %v1070, %v1068
  %v1549 = vpack.c.b16 %v1073, %v1071
  %v1550 = vpack.c.b16 %v1074, %v1072
  %v1551 = vpack.c.b16 %v1077, %v1075
  %v1552 = vpack.c.b16 %v1078, %v1076
  %v1553 = vpack.c.b16 %v1081, %v1079
  %v1554 = vpack.c.b16 %v1082, %v1080
  %v1555 = vpack.c.b16 %v1085, %v1083
  %v1556 = vpack.c.b16 %v1086, %v1084
  %v1557 = vpack.c.b16 %v1089, %v1087
  %v1558 = vpack.c.b16 %v1090, %v1088
  %v1559 = vpack.c.b16 %v1093, %v1091
  %v1560 = vpack.c.b16 %v1094, %v1092
  %v1561 = vpack.c.b16 %v1097, %v1095
  %v1562 = vpack.c.b16 %v1098, %v1096
  %v1563 = vpack.c.b16 %v1101, %v1099
  %v1564 = vpack.c.b16 %v1102, %v1100
  %v1565 = vpack.c.b16 %v1105, %v1103
  %v1566 = vpack.c.b16 %v1106, %v1104
  %v1567 = vpack.c.b16 %v1109, %v1107
  %v1568 = vpack.c.b16 %v1110, %v1108
  %v1569 = vpack.c.b16 %v1113, %v1111
  %v1570 = vpack.c.b16 %v1114, %v1112
  %v1571 = vpack.c.b16 %v1117, %v1115
  %v1572 = vpack.c.b16 %v1118, %v1116
  %v1573 = vpack.c.b16 %v1121, %v1119
  %v1574 = vpack.c.b16 %v1122, %v1120
  %v1575 = vpack.c.b16 %v1125, %v1123
  %v1576 = vpack.c.b16 %v1126, %v1124
  %v1577 = vpack.c.b16 %v1129, %v1127
  %v1578 = vpack.c.b16 %v1130, %v1128
  %v1579 = vpack.c.b16 %v1133, %v1131
  %v1580 = vpack.c.b16 %v1134, %v1132
  %v1581 = vpack.c.b16 %v1137, %v1135
  %v1582 = vpack.c.b16 %v1138, %v1136
  %v1583 = vpack.c.b16 %v1141, %v1139
  %v1584 = vpack.c.b16 %v1142, %v1140
  %v1585 = vpack.c.b16 %v1145, %v1143
  %v1586 = vpack.c.b16 %v1146, %v1144
  %v1587 = vpack.c.b16 %v1149, %v1147
  %v1588 = vpack.c.b16 %v1150, %v1148
  %v1589 = vpack.c.b16 %v1153, %v1151
  %v1590 = vpack.c.b16 %v1154, %v1152
  %v1591 = vpack.c.b16 %v1157, %v1155
  %v1592 = vpack.c.b16 %v1158, %v1156
  %v1593 = vpack.c.b16 %v1161, %v1159
  %v1594 = vpack.c.b16 %v1162, %v1160
  %v1595 = vpack.c.b16 %v1165, %v1163
  %v1596 = vpack.c.b16 %v1166, %v1164
  %v1597 = vpack.c.b16 %v1169, %v1167
  %v1598 = vpack.c.b16 %v1170, %v1168
  %v1599 = vpack.c.b16 %v1173, %v1171
  %v1600 = vpack.c.b16 %v1174, %v1172
  %v1601 = vpack.c.b16 %v1177, %v1175
  %v1602 = vpack.c.b16 %v1178, %v1176
  %v1603 = vpack.c.b16 %v1181, %v1179
  %v1604 = vpack.c.b16 %v1182, %v1180
  %v1605 = vpack.c.b16 %v1185, %v1183
  %v1606 = vpack.c.b16 %v1186, %v1184
  %v1607 = vpack.c.b16 %v1189, %v1187
  %v1608 = vpack.c.b16 %v1190, %v1188
  %v1609 = vpack.c.b16 %v1193, %v1191
  %v1610 = vpack.c.b16 %v1194, %v1192
  %v1611 = vpack.c.b16 %v1197, %v1195
  %v1612 = vpack.c.b16 %v1198, %v1196
  %v1613 = vpack.c.b16 %v1201, %v1199
  %v1614 = vpack.c.b16 %v1202, %v1200
  %v1615 = vpack.c.b16 %v1205, %v1203
  %v1616 = vpack.c.b16 %v1206, %v1204
  %v1617 = vpack.c.b16 %v1209, %v1207
  %v1618 = vpack.c.b16 %v1210, %v1208
  %v1619 = vpack.c.b16 %v1213, %v1211
  %v1620 = vpack.c.b16 %v1214, %v1212
  %v1621 = vpack.c.b16 %v1217, %v1215
  %v1622 = vpack.c.b16 %v1218, %v1216
  %v1623 = vpack.c.b16 %v1221, %v1219
  %v1624 = vpack.c.b16 %v1222, %v1220
  %v1625 = vpack.c.b16 %v1225, %v1223
  %v1626 = vpack.c.b16 %v1226, %v1224
  %v1627 = vpack.c.b16 %v1229, %v1227
  %v1628 = vpack.c.b16 %v1230, %v1228
  %v1629 = vpack.c.b16 %v1233, %v1231
  %v1630 = vpack.c.b16 %v1234, %v1232
  %v1631 = vpack.c.b16 %v1237, %v1235
  %v1632 = vpack.c.b16 %v1238, %v1236
  %v1633 = vpack.c.b16 %v1241, %v1239
  %v1634 = vpack.c.b16 %v1242, %v1240
  %v1635 = vpack.c.b16 %v1245, %v1243
  %v1636 = vpack.c.b16 %v1246, %v1244
  %v1637 = vpack.c.b16 %v1249, %v1247
  %v1638 = vpack.c.b16 %v1250, %v1248
  %v1639 = vpack.c.b16 %v1253, %v1251
  %v1640 = vpack.c.b16 %v1254, %v1252
  %v1641 = vpack.c.b16 %v1257, %v1255
  %v1642 = vpack.c.b16 %v1258, %v1256
  %v1643 = vpack.c.b16 %v1261, %v1259
  %v1644 = vpack.c.b16 %v1262, %v1260
  %v1645 = vpack.c.b16 %v1265, %v1263
  %v1646 = vpack.c.b16 %v1266, %v1264
  %v1647 = vpack.c.b16 %v1269, %v1267
  %v1648 = vpack.c.b16 %v1270, %v1268
  %v1649 = vpack.c.b16 %v1273, %v1271
  %v1650 = vpack.c.b16 %v1274, %v1272
  %v1651 = vpack.c.b16 %v1277, %v1275
  %v1652 = vpack.c.b16 %v1278, %v1276
  %v1653 = vpack.c.b16 %v1281, %v1279
  %v1654 = vpack.c.b16 %v1282, %v1280
  %v1655 = vpack.c.b16 %v1285, %v1283
  %v1656 = vpack.c.b16 %v1286, %v1284
  %v1657 = vpack.c.b16 %v1289, %v1287
  %v1658 = vpack.c.b16 %v1290, %v1288
  %v1659 = vpack.c.b16 %v1293, %v1291
  %v1660 = vpack.c.b16 %v1294, %v1292
  %v1661 = vpack.c.b16 %v1297, %v1295
  %v1662 = vpack.c.b16 %v1298, %v1296
  %v1663 = vpack.c.b16 %v1301, %v1299
  %v1664 = vpack.c.b16 %v1302, %v1300
  %v1665 = vpack.c.b16 %v1305, %v1303
  %v1666 = vpack.c.b16 %v1306, %v1304
  %v1667 = vpack.c.b16 %v1309, %v1307
  %v1668 = vpack.c.b16 %v1310, %v1308
  %v1669 = vpack.c.b16 %v1313, %v1311
  %v1670 = vpack.c.b16 %v1314, %v1312
  %v1671 = vpack.c.b16 %v1317, %v1315
  %v1672 = vpack.c.b16 %v1318, %v1316
  %v1673 = vpack.c.b16 %v1321, %v1319
  %v1674 = vpack.c.b16 %v1322, %v1320
  %v1675 = vpack.c.b16 %v1325, %v1323
  %v1676 = vpack.c.b16 %v1326, %v1324
  %v1677 = vpack.c.b16 %v1329, %v1327
  %v1678 = vpack.c.b16 %v1330, %v1328
  %v1679 = vpack.c.b16 %v1333, %v1331
  %v1680 = vpack.c.b16 %v1334, %v1332
  %v1681 = vpack.c.b16 %v1337, %v1335
  %v1682 = vpack.c.b16 %v1338, %v1336
  %v1683 = vpack.c.b16 %v1341, %v1339
  %v1684 = vpack.c.b16 %v1342, %v1340
  %v1685 = vpack.c.b16 %v1345, %v1343
  %v1686 = vpack.c.b16 %v1346, %v1344
  %v1687 = vpack.c.b16 %v1349, %v1347
  %v1688 = vpack.c.b16 %v1350, %v1348
  %v1689 = vpack.c.b16 %v1353, %v1351
  %v1690 = vpack.c.b16 %v1354, %v1352
  %v1691 = vpack.c.b16 %v1357, %v1355
  %v1692 = vpack.c.b16 %v1358, %v1356
  %v1693 = vpack.c.b16 %v1361, %v1359
  %v1694 = vpack.c.b16 %v1362, %v1360
  %v1695 = vpack.c.b16 %v1365, %v1363
  %v1696 = vpack.c.b16 %v1366, %v1364
  %v1697 = vpack.c.b16 %v1369, %v1367
  %v1698 = vpack.c.b16 %v1370, %v1368
  %v1699 = vpack.c.b16 %v1373, %v1371
  %v1700 = vpack.c.b16 %v1374, %v1372
  %v1701 = vpack.c.b16 %v1377, %v1375
  %v1702 = vpack.c.b16 %v1378, %v1376
  %v1703 = vpack.c.b16 %v1381, %v1379
  %v1704 = vpack.c.b16 %v1382, %v1380
  %v1705 = vpack.c.b16 %v1385, %v1383
  %v1706 = vpack.c.b16 %v1386, %v1384
  %v1707 = vpack.c.b16 %v1389, %v1387
  %v1708 = vpack.c.b16 %v1390, %v1388
  %v1709 = vpack.c.b16 %v1393, %v1391
  %v1710 = vpack.c.b16 %v1394, %v1392
  %v1711 = vpack.c.b16 %v1397, %v1395
  %v1712 = vpack.c.b16 %v1398, %v1396
  %v1713 = vpack.c.b16 %v1401, %v1399
  %v1714 = vpack.c.b16 %v1402, %v1400
  %v1715 = vpack.c.b16 %v1405, %v1403
  %v1716 = vpack.c.b16 %v1406, %v1404
  %v1717 = vpack.c.b16 %v1409, %v1407
  %v1718 = vpack.c.b16 %v1410, %v1408
  %v1719 = vpack.c.b16 %v1413, %v1411
  %v1720 = vpack.c.b16 %v1414, %v1412
  %v1721 = vpack.c.b16 %v1417, %v1415
  %v1722 = vpack.c.b16 %v1418, %v1416
  %v1723 = vpack.c.b16 %v1421, %v1419
  %v1724 = vpack.c.b16 %v1422, %v1420
  %v1725 = vpack.c.b16 %v1425, %v1423
  %v1726 = vpack.c.b16 %v1426, %v1424
  %v1727 = vpack.c.b16 %v1429, %v1427
  %v1728 = vpack.c.b16 %v1430, %v1428
  %v1729 = vpack.c.b16 %v1433, %v1431
  %v1730 = vpack.c.b16 %v1434, %v1432
  %v1731 = vpack.c.b16 %v1437, %v1435
  %v1732 = vpack.c.b16 %v1438, %v1436
  %v1733 = vpack.c.b16 %v1441, %v1439
  %v1734 = vpack.c.b16 %v1442, %v1440
  %v1735 = vpack.c.b16 %v1445, %v1443
  %v1736 = vpack.c.b16 %v1446, %v1444
  %v1737 = vpack.c.b16 %v1449, %v1447
  %v1738 = vpack.c.b16 %v1450, %v1448
  %v1739 = vpack.c.b16 %v1453, %v1451
  %v1740 = vpack.c.b16 %v1454, %v1452
  %v1741 = vpack.c.b16 %v1457, %v1455
  %v1742 = vpack.c.b16 %v1458, %v1456
  %v1743 = vpack.c.b16 %v1461, %v1459
  %v1744 = vpack.c.b16 %v1462, %v1460
  %v1745 = vpack.c.b16 %v1465, %v1463
  %v1746 = vpack.c.b16 %v1466, %v1464
  %v1747 = vpack.c.b16 %v1469, %v1467
  %v1748 = vpack.c.b16 %v1470, %v1468
  %v1749 = vpack.c.b16 %v1473, %v1471
  %v1750 = vpack.c.b16 %v1474, %v1472
  %v1751 = vpack.c.b16 %v1477, %v1475
  %v1752 = vpack.c.b16 %v1478, %v1476
  %v1753 = vpack.c.b16 %v1481, %v1479
  %v1754 = vpack.c.b16 %v1482, %v1480
  %v1755 = vpack.c.b16 %v1485, %v1483
  %v1756 = vpack.c.b16 %v1486, %v1484
  %v1757 = vpack.c.b16 %v1489, %v1487
  %v1758 = vpack.c.b16 %v1490, %v1488
  %v1759 = vpack.c.b16 %v1493, %v1491
  %v1760 = vpack.c.b16 %v1494, %v1492
  %v1761 = vpack.c.b16 %v1497, %v1495
  %v1762 = vpack.c.b16 %v1498, %v1496
  %v1763 = vpack.c.b16 %v1501, %v1499
  %v1764 = vpack.c.b16 %v1502, %v1500
  %v1765 = vpack.c.b16 %v1505, %v1503
  %v1766 = vpack.c.b16 %v1506, %v1504
  %v1767 = vpack.c.b16 %v1509, %v1507
  %v1768 = vpack.c.b16 %v1510, %v1508
  %v1769 = vpack.c.b16 %v1513, %v1511
  %v1770 = vpack.c.b16 %v1514, %v1512
  %2027 = vmatprep.subr.bf16.mxu0 %v1516
  %2028 = vmatpush1.bf16.msra.mxu0 %v1515
  %2029 = vmatprep.subr.bf16.mxu0 %v1518
  %2030 = vmatpush1.bf16.msra.mxu0 %v1517
  %2031 = vmatprep.subr.bf16.mxu0 %v1520
  %2032 = vmatpush1.bf16.msra.mxu0 %v1519
  %2033 = vmatprep.subr.bf16.mxu0 %v1522
  %2034 = vmatpush1.bf16.msra.mxu0 %v1521
  %2035 = vmatprep.subr.bf16.mxu0 %v1524
  %2036 = vmatpush1.bf16.msra.mxu0 %v1523
  %2037 = vmatprep.subr.bf16.mxu0 %v1526
  %2038 = vmatpush1.bf16.msra.mxu0 %v1525
  %2039 = vmatprep.subr.bf16.mxu0 %v1528
  %2040 = vmatpush1.bf16.msra.mxu0 %v1527
  %2041 = vmatprep.subr.bf16.mxu0 %v1530
  %2042 = vmatpush1.bf16.msra.mxu0 %v1529
  %2043 = vmatprep.subr.bf16.mxu0 %v1532
  %2044 = vmatpush1.bf16.msra.mxu0 %v1531
  %2045 = vmatprep.subr.bf16.mxu0 %v1534
  %2046 = vmatpush1.bf16.msra.mxu0 %v1533
  %2047 = vmatprep.subr.bf16.mxu0 %v1536
  %2048 = vmatpush1.bf16.msra.mxu0 %v1535
  %2049 = vmatprep.subr.bf16.mxu0 %v1538
  %2050 = vmatpush1.bf16.msra.mxu0 %v1537
  %2051 = vmatprep.subr.bf16.mxu0 %v1540
  %2052 = vmatpush1.bf16.msra.mxu0 %v1539
  %2053 = vmatprep.subr.bf16.mxu0 %v1542
  %2054 = vmatpush1.bf16.msra.mxu0 %v1541
  %2055 = vmatprep.subr.bf16.mxu0 %v1544
  %2056 = vmatpush1.bf16.msra.mxu0 %v1543
  %2057 = vmatprep.subr.bf16.mxu0 %v1546
  %2058 = vmatpush1.bf16.msra.mxu0 %v1545
  %2059 = vmatprep.mubr.bf16.mxu0 %v716
  %2060 = vmatmul.mubr.bf16.gmra.mrb[0].mxu0 %v715
  %v2061 = vpop.f32.mrb[0].mxu0
  %v2062 = vadd.f32 %v627, %v2061
  %v2063 = vpop.f32.mrb[0].mxu0
  %v2064 = vadd.f32 %v631, %v2063
  %v2065 = vpop.f32.mrb[0].mxu0
  %v2066 = vpop.f32.mrb[0].mxu0
  %2067 = vdwg.mxu0
  %2068 = vmatprep.subr.bf16.mxu0 %v1548
  %2069 = vmatpush1.bf16.msra.mxu0 %v1547
  %2070 = vmatprep.subr.bf16.mxu0 %v1550
  %2071 = vmatpush1.bf16.msra.mxu0 %v1549
  %2072 = vmatprep.subr.bf16.mxu0 %v1552
  %2073 = vmatpush1.bf16.msra.mxu0 %v1551
  %2074 = vmatprep.subr.bf16.mxu0 %v1554
  %2075 = vmatpush1.bf16.msra.mxu0 %v1553
  %2076 = vmatprep.subr.bf16.mxu0 %v1556
  %2077 = vmatpush1.bf16.msra.mxu0 %v1555
  %2078 = vmatprep.subr.bf16.mxu0 %v1558
  %2079 = vmatpush1.bf16.msra.mxu0 %v1557
  %2080 = vmatprep.subr.bf16.mxu0 %v1560
  %2081 = vmatpush1.bf16.msra.mxu0 %v1559
  %2082 = vmatprep.subr.bf16.mxu0 %v1562
  %2083 = vmatpush1.bf16.msra.mxu0 %v1561
  %2084 = vmatprep.subr.bf16.mxu0 %v1564
  %2085 = vmatpush1.bf16.msra.mxu0 %v1563
  %2086 = vmatprep.subr.bf16.mxu0 %v1566
  %2087 = vmatpush1.bf16.msra.mxu0 %v1565
  %2088 = vmatprep.subr.bf16.mxu0 %v1568
  %2089 = vmatpush1.bf16.msra.mxu0 %v1567
  %2090 = vmatprep.subr.bf16.mxu0 %v1570
  %2091 = vmatpush1.bf16.msra.mxu0 %v1569
  %2092 = vmatprep.subr.bf16.mxu0 %v1572
  %2093 = vmatpush1.bf16.msra.mxu0 %v1571
  %2094 = vmatprep.subr.bf16.mxu0 %v1574
  %2095 = vmatpush1.bf16.msra.mxu0 %v1573
  %2096 = vmatprep.subr.bf16.mxu0 %v1576
  %2097 = vmatpush1.bf16.msra.mxu0 %v1575
  %2098 = vmatprep.subr.bf16.mxu0 %v1578
  %2099 = vmatpush1.bf16.msra.mxu0 %v1577
  %2100 = vmatprep.mubr.bf16.mxu0 %v718
  %2101 = vmatmul.mubr.bf16.gmra.mrb[0].mxu0 %v717
  %v2102 = vpop.f32.mrb[0].mxu0
  %v2103 = vadd.f32 %v2062, %v2102
  %v2104 = vpop.f32.mrb[0].mxu0
  %v2105 = vadd.f32 %v2064, %v2104
  %v2106 = vpop.f32.mrb[0].mxu0
  %v2107 = vpop.f32.mrb[0].mxu0
  %2108 = vdwg.mxu0
  %2109 = vmatprep.subr.bf16.mxu0 %v1580
  %2110 = vmatpush1.bf16.msra.mxu0 %v1579
  %2111 = vmatprep.subr.bf16.mxu0 %v1582
  %2112 = vmatpush1.bf16.msra.mxu0 %v1581
  %2113 = vmatprep.subr.bf16.mxu0 %v1584
  %2114 = vmatpush1.bf16.msra.mxu0 %v1583
  %2115 = vmatprep.subr.bf16.mxu0 %v1586
  %2116 = vmatpush1.bf16.msra.mxu0 %v1585
  %2117 = vmatprep.subr.bf16.mxu0 %v1588
  %2118 = vmatpush1.bf16.msra.mxu0 %v1587
  %2119 = vmatprep.subr.bf16.mxu0 %v1590
  %2120 = vmatpush1.bf16.msra.mxu0 %v1589
  %2121 = vmatprep.subr.bf16.mxu0 %v1592
  %2122 = vmatpush1.bf16.msra.mxu0 %v1591
  %2123 = vmatprep.subr.bf16.mxu0 %v1594
  %2124 = vmatpush1.bf16.msra.mxu0 %v1593
  %2125 = vmatprep.subr.bf16.mxu0 %v1596
  %2126 = vmatpush1.bf16.msra.mxu0 %v1595
  %2127 = vmatprep.subr.bf16.mxu0 %v1598
  %2128 = vmatpush1.bf16.msra.mxu0 %v1597
  %2129 = vmatprep.subr.bf16.mxu0 %v1600
  %2130 = vmatpush1.bf16.msra.mxu0 %v1599
  %2131 = vmatprep.subr.bf16.mxu0 %v1602
  %2132 = vmatpush1.bf16.msra.mxu0 %v1601
  %2133 = vmatprep.subr.bf16.mxu0 %v1604
  %2134 = vmatpush1.bf16.msra.mxu0 %v1603
  %2135 = vmatprep.subr.bf16.mxu0 %v1606
  %2136 = vmatpush1.bf16.msra.mxu0 %v1605
  %2137 = vmatprep.subr.bf16.mxu0 %v1608
  %2138 = vmatpush1.bf16.msra.mxu0 %v1607
  %2139 = vmatprep.subr.bf16.mxu0 %v1610
  %2140 = vmatpush1.bf16.msra.mxu0 %v1609
  %2141 = vmatprep.mubr.bf16.mxu0 %v720
  %2142 = vmatmul.mubr.bf16.gmra.mrb[0].mxu0 %v719
  %v2143 = vpop.f32.mrb[0].mxu0
  %v2144 = vadd.f32 %v2103, %v2143
  %v2145 = vpop.f32.mrb[0].mxu0
  %v2146 = vadd.f32 %v2105, %v2145
  %v2147 = vpop.f32.mrb[0].mxu0
  %v2148 = vpop.f32.mrb[0].mxu0
  %2149 = vdwg.mxu0
  %2150 = vmatprep.subr.bf16.mxu0 %v1612
  %2151 = vmatpush1.bf16.msra.mxu0 %v1611
  %2152 = vmatprep.subr.bf16.mxu0 %v1614
  %2153 = vmatpush1.bf16.msra.mxu0 %v1613
  %2154 = vmatprep.subr.bf16.mxu0 %v1616
  %2155 = vmatpush1.bf16.msra.mxu0 %v1615
  %2156 = vmatprep.subr.bf16.mxu0 %v1618
  %2157 = vmatpush1.bf16.msra.mxu0 %v1617
  %2158 = vmatprep.subr.bf16.mxu0 %v1620
  %2159 = vmatpush1.bf16.msra.mxu0 %v1619
  %2160 = vmatprep.subr.bf16.mxu0 %v1622
  %2161 = vmatpush1.bf16.msra.mxu0 %v1621
  %2162 = vmatprep.subr.bf16.mxu0 %v1624
  %2163 = vmatpush1.bf16.msra.mxu0 %v1623
  %2164 = vmatprep.subr.bf16.mxu0 %v1626
  %2165 = vmatpush1.bf16.msra.mxu0 %v1625
  %2166 = vmatprep.subr.bf16.mxu0 %v1628
  %2167 = vmatpush1.bf16.msra.mxu0 %v1627
  %2168 = vmatprep.subr.bf16.mxu0 %v1630
  %2169 = vmatpush1.bf16.msra.mxu0 %v1629
  %2170 = vmatprep.subr.bf16.mxu0 %v1632
  %2171 = vmatpush1.bf16.msra.mxu0 %v1631
  %2172 = vmatprep.subr.bf16.mxu0 %v1634
  %2173 = vmatpush1.bf16.msra.mxu0 %v1633
  %2174 = vmatprep.subr.bf16.mxu0 %v1636
  %2175 = vmatpush1.bf16.msra.mxu0 %v1635
  %2176 = vmatprep.subr.bf16.mxu0 %v1638
  %2177 = vmatpush1.bf16.msra.mxu0 %v1637
  %2178 = vmatprep.subr.bf16.mxu0 %v1640
  %2179 = vmatpush1.bf16.msra.mxu0 %v1639
  %2180 = vmatprep.subr.bf16.mxu0 %v1642
  %2181 = vmatpush1.bf16.msra.mxu0 %v1641
  %2182 = vmatprep.mubr.bf16.mxu0 %v722
  %2183 = vmatmul.mubr.bf16.gmra.mrb[0].mxu0 %v721
  %v2184 = vpop.f32.mrb[0].mxu0
  %v2185 = vadd.f32 %v2144, %v2184
  %v2186 = vpop.f32.mrb[0].mxu0
  %v2187 = vadd.f32 %v2146, %v2186
  %v2188 = vpop.f32.mrb[0].mxu0
  %v2189 = vpop.f32.mrb[0].mxu0
  %2190 = vdwg.mxu0
  %2191 = vmatprep.subr.bf16.mxu0 %v1644
  %2192 = vmatpush1.bf16.msra.mxu0 %v1643
  %2193 = vmatprep.subr.bf16.mxu0 %v1646
  %2194 = vmatpush1.bf16.msra.mxu0 %v1645
  %2195 = vmatprep.subr.bf16.mxu0 %v1648
  %2196 = vmatpush1.bf16.msra.mxu0 %v1647
  %2197 = vmatprep.subr.bf16.mxu0 %v1650
  %2198 = vmatpush1.bf16.msra.mxu0 %v1649
  %2199 = vmatprep.subr.bf16.mxu0 %v1652
  %2200 = vmatpush1.bf16.msra.mxu0 %v1651
  %2201 = vmatprep.subr.bf16.mxu0 %v1654
  %2202 = vmatpush1.bf16.msra.mxu0 %v1653
  %2203 = vmatprep.subr.bf16.mxu0 %v1656
  %2204 = vmatpush1.bf16.msra.mxu0 %v1655
  %2205 = vmatprep.subr.bf16.mxu0 %v1658
  %2206 = vmatpush1.bf16.msra.mxu0 %v1657
  %2207 = vmatprep.subr.bf16.mxu0 %v1660
  %2208 = vmatpush1.bf16.msra.mxu0 %v1659
  %2209 = vmatprep.subr.bf16.mxu0 %v1662
  %2210 = vmatpush1.bf16.msra.mxu0 %v1661
  %2211 = vmatprep.subr.bf16.mxu0 %v1664
  %2212 = vmatpush1.bf16.msra.mxu0 %v1663
  %2213 = vmatprep.subr.bf16.mxu0 %v1666
  %2214 = vmatpush1.bf16.msra.mxu0 %v1665
  %2215 = vmatprep.subr.bf16.mxu0 %v1668
  %2216 = vmatpush1.bf16.msra.mxu0 %v1667
  %2217 = vmatprep.subr.bf16.mxu0 %v1670
  %2218 = vmatpush1.bf16.msra.mxu0 %v1669
  %2219 = vmatprep.subr.bf16.mxu0 %v1672
  %2220 = vmatpush1.bf16.msra.mxu0 %v1671
  %2221 = vmatprep.subr.bf16.mxu0 %v1674
  %2222 = vmatpush1.bf16.msra.mxu0 %v1673
  %2223 = vmatprep.mubr.bf16.mxu0 %v724
  %2224 = vmatmul.mubr.bf16.gmra.mrb[0].mxu0 %v723
  %v2225 = vpop.f32.mrb[0].mxu0
  %v2226 = vadd.f32 %v2185, %v2225
  %v2227 = vpop.f32.mrb[0].mxu0
  %v2228 = vadd.f32 %v2187, %v2227
  %v2229 = vpop.f32.mrb[0].mxu0
  %v2230 = vpop.f32.mrb[0].mxu0
  %2231 = vdwg.mxu0
  %2232 = vmatprep.subr.bf16.mxu0 %v1676
  %2233 = vmatpush1.bf16.msra.mxu0 %v1675
  %2234 = vmatprep.subr.bf16.mxu0 %v1678
  %2235 = vmatpush1.bf16.msra.mxu0 %v1677
  %2236 = vmatprep.subr.bf16.mxu0 %v1680
  %2237 = vmatpush1.bf16.msra.mxu0 %v1679
  %2238 = vmatprep.subr.bf16.mxu0 %v1682
  %2239 = vmatpush1.bf16.msra.mxu0 %v1681
  %2240 = vmatprep.subr.bf16.mxu0 %v1684
  %2241 = vmatpush1.bf16.msra.mxu0 %v1683
  %2242 = vmatprep.subr.bf16.mxu0 %v1686
  %2243 = vmatpush1.bf16.msra.mxu0 %v1685
  %2244 = vmatprep.subr.bf16.mxu0 %v1688
  %2245 = vmatpush1.bf16.msra.mxu0 %v1687
  %2246 = vmatprep.subr.bf16.mxu0 %v1690
  %2247 = vmatpush1.bf16.msra.mxu0 %v1689
  %2248 = vmatprep.subr.bf16.mxu0 %v1692
  %2249 = vmatpush1.bf16.msra.mxu0 %v1691
  %2250 = vmatprep.subr.bf16.mxu0 %v1694
  %2251 = vmatpush1.bf16.msra.mxu0 %v1693
  %2252 = vmatprep.subr.bf16.mxu0 %v1696
  %2253 = vmatpush1.bf16.msra.mxu0 %v1695
  %2254 = vmatprep.subr.bf16.mxu0 %v1698
  %2255 = vmatpush1.bf16.msra.mxu0 %v1697
  %2256 = vmatprep.subr.bf16.mxu0 %v1700
  %2257 = vmatpush1.bf16.msra.mxu0 %v1699
  %2258 = vmatprep.subr.bf16.mxu0 %v1702
  %2259 = vmatpush1.bf16.msra.mxu0 %v1701
  %2260 = vmatprep.subr.bf16.mxu0 %v1704
  %2261 = vmatpush1.bf16.msra.mxu0 %v1703
  %2262 = vmatprep.subr.bf16.mxu0 %v1706
  %2263 = vmatpush1.bf16.msra.mxu0 %v1705
  %2264 = vmatprep.mubr.bf16.mxu0 %v726
  %2265 = vmatmul.mubr.bf16.gmra.mrb[0].mxu0 %v725
  %v2266 = vpop.f32.mrb[0].mxu0
  %v2267 = vadd.f32 %v2226, %v2266
  %v2268 = vpop.f32.mrb[0].mxu0
  %v2269 = vadd.f32 %v2228, %v2268
  %v2270 = vpop.f32.mrb[0].mxu0
  %v2271 = vpop.f32.mrb[0].mxu0
  %2272 = vdwg.mxu0
  %2273 = vmatprep.subr.bf16.mxu0 %v1708
  %2274 = vmatpush1.bf16.msra.mxu0 %v1707
  %2275 = vmatprep.subr.bf16.mxu0 %v1710
  %2276 = vmatpush1.bf16.msra.mxu0 %v1709
  %2277 = vmatprep.subr.bf16.mxu0 %v1712
  %2278 = vmatpush1.bf16.msra.mxu0 %v1711
  %2279 = vmatprep.subr.bf16.mxu0 %v1714
  %2280 = vmatpush1.bf16.msra.mxu0 %v1713
  %2281 = vmatprep.subr.bf16.mxu0 %v1716
  %2282 = vmatpush1.bf16.msra.mxu0 %v1715
  %2283 = vmatprep.subr.bf16.mxu0 %v1718
  %2284 = vmatpush1.bf16.msra.mxu0 %v1717
  %2285 = vmatprep.subr.bf16.mxu0 %v1720
  %2286 = vmatpush1.bf16.msra.mxu0 %v1719
  %2287 = vmatprep.subr.bf16.mxu0 %v1722
  %2288 = vmatpush1.bf16.msra.mxu0 %v1721
  %2289 = vmatprep.subr.bf16.mxu0 %v1724
  %2290 = vmatpush1.bf16.msra.mxu0 %v1723
  %2291 = vmatprep.subr.bf16.mxu0 %v1726
  %2292 = vmatpush1.bf16.msra.mxu0 %v1725
  %2293 = vmatprep.subr.bf16.mxu0 %v1728
  %2294 = vmatpush1.bf16.msra.mxu0 %v1727
  %2295 = vmatprep.subr.bf16.mxu0 %v1730
  %2296 = vmatpush1.bf16.msra.mxu0 %v1729
  %2297 = vmatprep.subr.bf16.mxu0 %v1732
  %2298 = vmatpush1.bf16.msra.mxu0 %v1731
  %2299 = vmatprep.subr.bf16.mxu0 %v1734
  %2300 = vmatpush1.bf16.msra.mxu0 %v1733
  %2301 = vmatprep.subr.bf16.mxu0 %v1736
  %2302 = vmatpush1.bf16.msra.mxu0 %v1735
  %2303 = vmatprep.subr.bf16.mxu0 %v1738
  %2304 = vmatpush1.bf16.msra.mxu0 %v1737
  %2305 = vmatprep.mubr.bf16.mxu0 %v728
  %2306 = vmatmul.mubr.bf16.gmra.mrb[0].mxu0 %v727
  %v2307 = vpop.f32.mrb[0].mxu0
  %v2308 = vadd.f32 %v2267, %v2307
  %v2309 = vpop.f32.mrb[0].mxu0
  %v2310 = vadd.f32 %v2269, %v2309
  %v2311 = vpop.f32.mrb[0].mxu0
  %v2312 = vpop.f32.mrb[0].mxu0
  %2313 = vdwg.mxu0
  %2314 = vmatprep.subr.bf16.mxu0 %v1740
  %2315 = vmatpush1.bf16.msra.mxu0 %v1739
  %2316 = vmatprep.subr.bf16.mxu0 %v1742
  %2317 = vmatpush1.bf16.msra.mxu0 %v1741
  %2318 = vmatprep.subr.bf16.mxu0 %v1744
  %2319 = vmatpush1.bf16.msra.mxu0 %v1743
  %2320 = vmatprep.subr.bf16.mxu0 %v1746
  %2321 = vmatpush1.bf16.msra.mxu0 %v1745
  %2322 = vmatprep.subr.bf16.mxu0 %v1748
  %2323 = vmatpush1.bf16.msra.mxu0 %v1747
  %2324 = vmatprep.subr.bf16.mxu0 %v1750
  %2325 = vmatpush1.bf16.msra.mxu0 %v1749
  %2326 = vmatprep.subr.bf16.mxu0 %v1752
  %2327 = vmatpush1.bf16.msra.mxu0 %v1751
  %2328 = vmatprep.subr.bf16.mxu0 %v1754
  %2329 = vmatpush1.bf16.msra.mxu0 %v1753
  %2330 = vmatprep.subr.bf16.mxu0 %v1756
  %2331 = vmatpush1.bf16.msra.mxu0 %v1755
  %2332 = vmatprep.subr.bf16.mxu0 %v1758
  %2333 = vmatpush1.bf16.msra.mxu0 %v1757
  %2334 = vmatprep.subr.bf16.mxu0 %v1760
  %2335 = vmatpush1.bf16.msra.mxu0 %v1759
  %2336 = vmatprep.subr.bf16.mxu0 %v1762
  %2337 = vmatpush1.bf16.msra.mxu0 %v1761
  %2338 = vmatprep.subr.bf16.mxu0 %v1764
  %2339 = vmatpush1.bf16.msra.mxu0 %v1763
  %2340 = vmatprep.subr.bf16.mxu0 %v1766
  %2341 = vmatpush1.bf16.msra.mxu0 %v1765
  %2342 = vmatprep.subr.bf16.mxu0 %v1768
  %2343 = vmatpush1.bf16.msra.mxu0 %v1767
  %2344 = vmatprep.subr.bf16.mxu0 %v1770
  %2345 = vmatpush1.bf16.msra.mxu0 %v1769
  %2346 = vmatprep.mubr.bf16.mxu0 %v730
  %2347 = vmatmul.mubr.bf16.gmra.mrb[0].mxu0 %v729
  %v2348 = vpop.f32.mrb[0].mxu0
  %v2349 = vadd.f32 %v2308, %v2348
  %v2350 = vpop.f32.mrb[0].mxu0
  %v2351 = vadd.f32 %v2310, %v2350
  %v2352 = vpop.f32.mrb[0].mxu0
  %v2353 = vpop.f32.mrb[0].mxu0
  %2354 = vdwg.mxu0
  %v2357 = vcombine.low %v2349, %v2351
  %v2359 = vunpack.c.l.s4 1983009808
  %v2360 = vunpack.c.0.s8 %v2359
  %v2361 = vlaneseq
  %v2362 = vshrl.u32 %v2361, 7
  %v2363 = vsub.s32 %v2360, %v2362
  %v2364 = vrot.slane %v2357, %v2363
  %vm2366 = vcmask 1041408
  %vm2367 = vcmask 257026
  %vm2368 = vmor %vm2367, %vm2366
  %2369 = vst.msk [vmem:[%s3] sm:$0xf] %vm2368, %v2364
  // Predicated region
  $region14: #{im_embed_forward.1} parent=0 // pred_check
    _
  $region15: #{im_embed_forward.1} parent=0 // pred_check_branch
    %2371 = sbr.rel (0) target = $region17
  $region16: #{im_embed_forward.1} parent=0 // pred_region
    _
  $region17: #{im_embed_forward.1} parent=0 // pred_fallthru
    _
  // Predicated region
  $region18: #{im_embed_forward.1} parent=0 // pred_check
    _
  $region19: #{im_embed_forward.1} parent=0 // pred_check_branch
    %2373 = sbr.rel (0) target = $region21
  $region20: #{im_embed_forward.1} parent=0 // pred_region
    _
  $region21: #{im_embed_forward.1} parent=0 // pred_fallthru
    _

</llo_original>
